<compile_context>
chip_gen: v7x
topology: tpu7x:2x2x1
jax: 0.10.0
libtpu: 0.0.40
codegen_flags: <defaults>
</compile_context>

<pallas_src>
import functools

import jax
import jax.numpy as jnp
import numpy as np
from jax.experimental import pallas as pl
from jax.experimental.pallas import tpu as pltpu

KSIZE = 7
PAD = (KSIZE - 1) // 2
_NW = KSIZE * KSIZE  # 49 weights per pooled channel


def _spatial_gate_kernel(x_ref, mask_ref, w_ref, o_ref, *, W, C, NB):
    """One grid step = NB batch elements.

    x_ref   : (NB, C, HWp) VMEM, input dtype (HWp = H*W padded to a multiple of 128)
    mask_ref: (16, HWp)    VMEM, f32. rows 0..6 = column masks (kw),
                                      rows 7..13 = row masks (kh), 14/15 unused.
    w_ref   : (99,)        SMEM, f32. [w_max(49) | w_mean(49) | bn_shift]
                                      (BN scale already folded into the weights)
    o_ref   : (NB, C, HWp) VMEM, input dtype
    """
    HWp = x_ref.shape[-1]

    # ---- ChannelPool: per-image max / mean over C (only 2*NB maps go to f32) ----
    pooled = []
    for b in range(NB):
        xb = x_ref[b]                                              # (C, HWp), input dtype
        pooled.append(jnp.max(xb, axis=0, keepdims=True).astype(jnp.float32))
    for b in range(NB):
        xb = x_ref[b]
        # TODO(synk): mean-sum accumulates in the input dtype; for 16-bit inputs
        # with very large C a chunked f32 accumulation would be more accurate.
        pooled.append((jnp.sum(xb, axis=0, keepdims=True) * (1.0 / C))
                      .astype(jnp.float32))
    stacked = jnp.concatenate(pooled, axis=0)                      # (2*NB, HWp) f32

    # ---- 7x7 conv (2->1, zero pad 3): 7 lane (column) shifts then 7 row shifts,
    #      on the stacked (max|mean) maps.  Flat-roll wrap-around is always killed
    #      by the validity masks (padding lanes are masked to zero as well). -----
    sh = []
    for kw in range(KSIZE):
        dw = kw - PAD
        s = stacked if dw == 0 else pltpu.roll(stacked, (-dw) % HWp, axis=1)
        sh.append(s * mask_ref[kw:kw + 1, :])                      # (2*NB, HWp)

    # rows [0, NB) hold the max maps, rows [NB, 2*NB) the mean maps.
    is_max_half = jax.lax.broadcasted_iota(jnp.int32, (2 * NB, 1), 0) < NB

    acc = jnp.zeros((2 * NB, HWp), jnp.float32)
    for kh in range(KSIZE):
        dh = kh - PAD
        inner = jnp.zeros((2 * NB, HWp), jnp.float32)
        for kw in range(KSIZE):
            w_max = w_ref[0 * _NW + kh * KSIZE + kw]               # SMEM scalar
            w_mean = w_ref[1 * _NW + kh * KSIZE + kw]
            wsel = jnp.where(is_max_half, w_max, w_mean)           # (2*NB, 1)
            inner = inner + wsel * sh[kw]
        if dh != 0:
            inner = pltpu.roll(inner, (-(dh * W)) % HWp, axis=1)   # out[i] = in[i + dh*W]
        acc = acc + inner * mask_ref[KSIZE + kh:KSIZE + kh + 1, :]

    # combine the max- / mean-weighted halves, add the folded BN shift.
    conv = acc[:NB] + acc[NB:] + w_ref[2 * _NW]                    # (NB, HWp) f32

    # ---- sigmoid gate + apply (gate cast down; multiply in the input dtype) ----
    gate = jax.nn.sigmoid(conv).astype(o_ref.dtype)                # (NB, HWp)
    for b in range(NB):
        o_ref[b] = (x_ref[b] * gate[b:b + 1, :]).astype(o_ref.dtype)


def spatial_gate(x, conv_w, bn_gamma, bn_beta, bn_mean, bn_var, eps=1e-5):
    n, c, h, w = x.shape
    hw = h * w
    hw_pad = ((hw + 127) // 128) * 128
    itemsize = x.dtype.itemsize

    # ---- fold BatchNorm (inference / running stats) into conv weights + shift ----
    bn_scale = (bn_gamma / jnp.sqrt(bn_var + eps)).astype(jnp.float32)   # (1,)
    bn_shift = (bn_beta - bn_mean * bn_scale).astype(jnp.float32)        # (1,)
    wt = conv_w[0].astype(jnp.float32) * bn_scale[0]                     # (2,7,7)
    params = jnp.concatenate([wt.reshape(-1), bn_shift.reshape(1)])      # (99,)

    # ---- precomputed validity masks (also mask off the lane padding) ------------
    idx = jnp.arange(hw_pad, dtype=jnp.int32)
    row = idx // w
    col = idx % w
    valid = idx < hw
    mask_rows = []
    for kw in range(KSIZE):
        dw = kw - PAD
        mask_rows.append((col + dw >= 0) & (col + dw < w) & valid)
    for kh in range(KSIZE):
        dh = kh - PAD
        mask_rows.append((row + dh >= 0) & (row + dh < h) & valid)
    mask_rows += [jnp.zeros((hw_pad,), jnp.bool_)] * 2                   # pad to 16 rows
    masks = jnp.stack(mask_rows, axis=0).astype(jnp.float32)             # (16, hw_pad)

    # ---- lane-dense flat spatial layout, padded to a multiple of 128 ------------
    x_flat = x.reshape(n, c, hw)
    if hw_pad != hw:
        x_flat = jnp.pad(x_flat, ((0, 0), (0, 0), (0, hw_pad - hw)))

    # ---- generation-aware VMEM budget & batch-block size ------------------------
    try:
        vmem_cap = int(pltpu.get_tpu_info().vmem_capacity_bytes)
    except Exception:
        vmem_cap = 64 * 2**20            # v7x has the smallest VMEM; safe fallback
    vmem_budget = int(vmem_cap * 3 // 4)

    # per-batch bytes: in + out blocks double buffered, plus f32 conv temporaries.
    per_nb = 4 * c * hw_pad * itemsize + 96 * hw_pad
    fixed = 2 * 16 * hw_pad * 4 + (4 << 20)
    max_nb = max(1, (vmem_budget - fixed) // per_nb)
    nb = int(min(n, max_nb, 16))         # cap bounds in-kernel unrolling
    while nb > 1 and n % nb:
        nb -= 1
    # TODO(synk): for very large C*HW a single (nb=1) block may still exceed the
    # v7x budget; a C-tiled reduction grid axis would be needed there.
    # TODO(synk): when the grid collapses to one step, one v7x TensorCore idles;
    # an extra parallel axis (e.g. H halves with halo) would use both cores.

    kernel = functools.partial(_spatial_gate_kernel, W=w, C=c, NB=nb)

    grid_spec = pltpu.PrefetchScalarGridSpec(
        num_scalar_prefetch=0,
        grid=(n // nb,),
        in_specs=[
            pl.BlockSpec((nb, c, hw_pad), lambda i: (i, 0, 0)),
            pl.BlockSpec((16, hw_pad), lambda i: (0, 0)),
            pl.BlockSpec(memory_space=pltpu.MemorySpace.SMEM),
        ],
        out_specs=pl.BlockSpec((nb, c, hw_pad), lambda i: (i, 0, 0)),
    )

    out_flat = pl.pallas_call(
        kernel,
        out_shape=jax.ShapeDtypeStruct((n, c, hw_pad), x.dtype),
        grid_spec=grid_spec,
        compiler_params=pltpu.CompilerParams(
            dimension_semantics=("parallel",),
            vmem_limit_bytes=vmem_budget,
        ),
    )(x_flat, masks, params)

    if hw_pad != hw:
        out_flat = out_flat[:, :, :hw]
    return out_flat.reshape(n, c, h, w)


def spatial_gate_reference(x, conv_w, bn_gamma, bn_beta, bn_mean, bn_var, eps=1e-5):
    c_max = jnp.max(x, axis=1, keepdims=True)
    c_mean = jnp.mean(x, axis=1, keepdims=True)
    comp = jnp.concatenate([c_max, c_mean], axis=1)                      # (N,2,H,W)
    conv = jax.lax.conv_general_dilated(
        comp, conv_w, window_strides=(1, 1),
        padding=[(PAD, PAD), (PAD, PAD)],
        dimension_numbers=("NCHW", "OIHW", "NCHW"))
    g = bn_gamma.reshape(1, -1, 1, 1)
    b = bn_beta.reshape(1, -1, 1, 1)
    m = bn_mean.reshape(1, -1, 1, 1)
    v = bn_var.reshape(1, -1, 1, 1)
    y = g * (conv - m) / jnp.sqrt(v + eps) + b
    return x * jax.nn.sigmoid(y)


if __name__ == "__main__":
    key = jax.random.PRNGKey(0)
    kx, kw = jax.random.split(key)

    x = jax.random.normal(kx, (2, 4, 16, 16), dtype=jnp.float32)
    conv_w = jax.random.normal(kw, (1, 2, KSIZE, KSIZE), dtype=jnp.float32) * 0.1
    bn_gamma = jnp.array([1.2], jnp.float32)
    bn_beta = jnp.array([0.1], jnp.float32)
    bn_mean = jnp.array([0.05], jnp.float32)
    bn_var = jnp.array([0.8], jnp.float32)

    out = spatial_gate(x, conv_w, bn_gamma, bn_beta, bn_mean, bn_var)
    out = jax.block_until_ready(out)

    ref = spatial_gate_reference(x, conv_w, bn_gamma, bn_beta, bn_mean, bn_var)
    np.testing.assert_allclose(np.asarray(out), np.asarray(ref), atol=1e-4, rtol=1e-4)
    print("KERNEL_OK")
</pallas_src>

<mosaic_0001>
module attributes {stable_mosaic.version = 11 : i64} {
  func.func @_spatial_gate_kernel(%arg0: i32, %arg1: memref<2x4x256xf32, #tpu.memory_space<vmem>>, %arg2: memref<16x256xf32, #tpu.memory_space<vmem>>, %arg3: memref<99xf32, #tpu.memory_space<smem>>, %arg4: memref<2x4x256xf32, #tpu.memory_space<vmem>>) attributes {dimension_semantics = [#tpu.dimension_semantics<parallel>], iteration_bounds = array<i64: 1>, scalar_prefetch = 0 : i64, scratch_operands = 0 : i64, tpu.core_type = #tpu.core_type<tc>, window_params = [{transform_indices = @transform_0, window_bounds = array<i64: 2, 4, 256>}, {pipeline_mode = #tpu.pipeline_mode<synchronous>, transform_indices = @transform_1, window_bounds = array<i64: 16, 256>}, {transform_indices = @transform_2, window_bounds = array<i64: 99>}, {transform_indices = @transform_3, window_bounds = array<i64: 2, 4, 256>}]} {
    %c0 = arith.constant 0 : index
    %c0_0 = arith.constant 0 : index
    %c0_1 = arith.constant 0 : index
    %0 = vector.load %arg1[%c0, %c0_0, %c0_1] : memref<2x4x256xf32, #tpu.memory_space<vmem>>, vector<1x4x256xf32>
    %1 = vector.shape_cast %0 : vector<1x4x256xf32> to vector<4x256xf32>
    %cst = arith.constant dense<0xFF800000> : vector<256xf32>
    %2 = vector.multi_reduction <maximumf>, %1, %cst [0] : vector<4x256xf32> to vector<256xf32>
    %3 = vector.shape_cast %2 : vector<256xf32> to vector<1x256xf32>
    %c1 = arith.constant 1 : index
    %c0_2 = arith.constant 0 : index
    %c0_3 = arith.constant 0 : index
    %4 = vector.load %arg1[%c1, %c0_2, %c0_3] : memref<2x4x256xf32, #tpu.memory_space<vmem>>, vector<1x4x256xf32>
    %5 = vector.shape_cast %4 : vector<1x4x256xf32> to vector<4x256xf32>
    %cst_4 = arith.constant dense<0xFF800000> : vector<256xf32>
    %6 = vector.multi_reduction <maximumf>, %5, %cst_4 [0] : vector<4x256xf32> to vector<256xf32>
    %7 = vector.shape_cast %6 : vector<256xf32> to vector<1x256xf32>
    %c0_5 = arith.constant 0 : index
    %c0_6 = arith.constant 0 : index
    %c0_7 = arith.constant 0 : index
    %8 = vector.load %arg1[%c0_5, %c0_6, %c0_7] : memref<2x4x256xf32, #tpu.memory_space<vmem>>, vector<1x4x256xf32>
    %9 = vector.shape_cast %8 : vector<1x4x256xf32> to vector<4x256xf32>
    %cst_8 = arith.constant dense<0.000000e+00> : vector<256xf32>
    %10 = vector.multi_reduction <add>, %9, %cst_8 [0] : vector<4x256xf32> to vector<256xf32>
    %11 = vector.shape_cast %10 : vector<256xf32> to vector<1x256xf32>
    %cst_9 = arith.constant 2.500000e-01 : f32
    %12 = vector.broadcast %cst_9 : f32 to vector<1x256xf32>
    %13 = arith.mulf %11, %12 : vector<1x256xf32>
    %c1_10 = arith.constant 1 : index
    %c0_11 = arith.constant 0 : index
    %c0_12 = arith.constant 0 : index
    %14 = vector.load %arg1[%c1_10, %c0_11, %c0_12] : memref<2x4x256xf32, #tpu.memory_space<vmem>>, vector<1x4x256xf32>
    %15 = vector.shape_cast %14 : vector<1x4x256xf32> to vector<4x256xf32>
    %cst_13 = arith.constant dense<0.000000e+00> : vector<256xf32>
    %16 = vector.multi_reduction <add>, %15, %cst_13 [0] : vector<4x256xf32> to vector<256xf32>
    %17 = vector.shape_cast %16 : vector<256xf32> to vector<1x256xf32>
    %cst_14 = arith.constant 2.500000e-01 : f32
    %18 = vector.broadcast %cst_14 : f32 to vector<1x256xf32>
    %19 = arith.mulf %17, %18 : vector<1x256xf32>
    %20 = tpu.concatenate %3, %7, %13, %19 in 0 : vector<1x256xf32>, vector<1x256xf32>, vector<1x256xf32>, vector<1x256xf32> -> vector<4x256xf32>
    %c3_i32 = arith.constant 3 : i32
    %21 = tpu.dynamic_rotate %20 by %c3_i32 dim 1 : vector<4x256xf32>, i32 -> vector<4x256xf32>
    %c0_15 = arith.constant 0 : index
    %c0_16 = arith.constant 0 : index
    %22 = vector.load %arg2[%c0_15, %c0_16] : memref<16x256xf32, #tpu.memory_space<vmem>>, vector<1x256xf32>
    %23 = vector.broadcast %22 : vector<1x256xf32> to vector<4x256xf32>
    %24 = arith.mulf %21, %23 : vector<4x256xf32>
    %c2_i32 = arith.constant 2 : i32
    %25 = tpu.dynamic_rotate %20 by %c2_i32 dim 1 : vector<4x256xf32>, i32 -> vector<4x256xf32>
    %c1_17 = arith.constant 1 : index
    %c0_18 = arith.constant 0 : index
    %26 = vector.load %arg2[%c1_17, %c0_18] : memref<16x256xf32, #tpu.memory_space<vmem>>, vector<1x256xf32>
    %27 = vector.broadcast %26 : vector<1x256xf32> to vector<4x256xf32>
    %28 = arith.mulf %25, %27 : vector<4x256xf32>
    %c1_i32 = arith.constant 1 : i32
    %29 = tpu.dynamic_rotate %20 by %c1_i32 dim 1 : vector<4x256xf32>, i32 -> vector<4x256xf32>
    %c2 = arith.constant 2 : index
    %c0_19 = arith.constant 0 : index
    %30 = vector.load %arg2[%c2, %c0_19] : memref<16x256xf32, #tpu.memory_space<vmem>>, vector<1x256xf32>
    %31 = vector.broadcast %30 : vector<1x256xf32> to vector<4x256xf32>
    %32 = arith.mulf %29, %31 : vector<4x256xf32>
    %c3 = arith.constant 3 : index
    %c0_20 = arith.constant 0 : index
    %33 = vector.load %arg2[%c3, %c0_20] : memref<16x256xf32, #tpu.memory_space<vmem>>, vector<1x256xf32>
    %34 = vector.broadcast %33 : vector<1x256xf32> to vector<4x256xf32>
    %35 = arith.mulf %20, %34 : vector<4x256xf32>
    %c255_i32 = arith.constant 255 : i32
    %36 = tpu.dynamic_rotate %20 by %c255_i32 dim 1 : vector<4x256xf32>, i32 -> vector<4x256xf32>
    %c4 = arith.constant 4 : index
    %c0_21 = arith.constant 0 : index
    %37 = vector.load %arg2[%c4, %c0_21] : memref<16x256xf32, #tpu.memory_space<vmem>>, vector<1x256xf32>
    %38 = vector.broadcast %37 : vector<1x256xf32> to vector<4x256xf32>
    %39 = arith.mulf %36, %38 : vector<4x256xf32>
    %c254_i32 = arith.constant 254 : i32
    %40 = tpu.dynamic_rotate %20 by %c254_i32 dim 1 : vector<4x256xf32>, i32 -> vector<4x256xf32>
    %c5 = arith.constant 5 : index
    %c0_22 = arith.constant 0 : index
    %41 = vector.load %arg2[%c5, %c0_22] : memref<16x256xf32, #tpu.memory_space<vmem>>, vector<1x256xf32>
    %42 = vector.broadcast %41 : vector<1x256xf32> to vector<4x256xf32>
    %43 = arith.mulf %40, %42 : vector<4x256xf32>
    %c253_i32 = arith.constant 253 : i32
    %44 = tpu.dynamic_rotate %20 by %c253_i32 dim 1 : vector<4x256xf32>, i32 -> vector<4x256xf32>
    %c6 = arith.constant 6 : index
    %c0_23 = arith.constant 0 : index
    %45 = vector.load %arg2[%c6, %c0_23] : memref<16x256xf32, #tpu.memory_space<vmem>>, vector<1x256xf32>
    %46 = vector.broadcast %45 : vector<1x256xf32> to vector<4x256xf32>
    %47 = arith.mulf %44, %46 : vector<4x256xf32>
    %48 = tpu.iota {dimensions = array<i32: 0>} : vector<4x1xi32>
    %c2_i32_24 = arith.constant 2 : i32
    %49 = vector.broadcast %c2_i32_24 : i32 to vector<4x1xi32>
    %50 = arith.cmpi slt, %48, %49 : vector<4x1xi32>
    %cst_25 = arith.constant 0.000000e+00 : f32
    %51 = vector.broadcast %cst_25 : f32 to vector<4x256xf32>
    %cst_26 = arith.constant 0.000000e+00 : f32
    %52 = vector.broadcast %cst_26 : f32 to vector<4x256xf32>
    %c0_27 = arith.constant 0 : index
    %53 = memref.load %arg3[%c0_27] : memref<99xf32, #tpu.memory_space<smem>>
    %c49 = arith.constant 49 : index
    %54 = memref.load %arg3[%c49] : memref<99xf32, #tpu.memory_space<smem>>
    %55 = vector.broadcast %53 : f32 to vector<4x1xf32>
    %56 = vector.broadcast %54 : f32 to vector<4x1xf32>
    %57 = arith.select %50, %55, %56 : vector<4x1xi1>, vector<4x1xf32>
    %58 = vector.broadcast %57 : vector<4x1xf32> to vector<4x256xf32>
    %59 = arith.mulf %58, %24 : vector<4x256xf32>
    %60 = arith.addf %52, %59 : vector<4x256xf32>
    %c1_28 = arith.constant 1 : index
    %61 = memref.load %arg3[%c1_28] : memref<99xf32, #tpu.memory_space<smem>>
    %c50 = arith.constant 50 : index
    %62 = memref.load %arg3[%c50] : memref<99xf32, #tpu.memory_space<smem>>
    %63 = vector.broadcast %61 : f32 to vector<4x1xf32>
    %64 = vector.broadcast %62 : f32 to vector<4x1xf32>
    %65 = arith.select %50, %63, %64 : vector<4x1xi1>, vector<4x1xf32>
    %66 = vector.broadcast %65 : vector<4x1xf32> to vector<4x256xf32>
    %67 = arith.mulf %66, %28 : vector<4x256xf32>
    %68 = arith.addf %60, %67 : vector<4x256xf32>
    %c2_29 = arith.constant 2 : index
    %69 = memref.load %arg3[%c2_29] : memref<99xf32, #tpu.memory_space<smem>>
    %c51 = arith.constant 51 : index
    %70 = memref.load %arg3[%c51] : memref<99xf32, #tpu.memory_space<smem>>
    %71 = vector.broadcast %69 : f32 to vector<4x1xf32>
    %72 = vector.broadcast %70 : f32 to vector<4x1xf32>
    %73 = arith.select %50, %71, %72 : vector<4x1xi1>, vector<4x1xf32>
    %74 = vector.broadcast %73 : vector<4x1xf32> to vector<4x256xf32>
    %75 = arith.mulf %74, %32 : vector<4x256xf32>
    %76 = arith.addf %68, %75 : vector<4x256xf32>
    %c3_30 = arith.constant 3 : index
    %77 = memref.load %arg3[%c3_30] : memref<99xf32, #tpu.memory_space<smem>>
    %c52 = arith.constant 52 : index
    %78 = memref.load %arg3[%c52] : memref<99xf32, #tpu.memory_space<smem>>
    %79 = vector.broadcast %77 : f32 to vector<4x1xf32>
    %80 = vector.broadcast %78 : f32 to vector<4x1xf32>
    %81 = arith.select %50, %79, %80 : vector<4x1xi1>, vector<4x1xf32>
    %82 = vector.broadcast %81 : vector<4x1xf32> to vector<4x256xf32>
    %83 = arith.mulf %82, %35 : vector<4x256xf32>
    %84 = arith.addf %76, %83 : vector<4x256xf32>
    %c4_31 = arith.constant 4 : index
    %85 = memref.load %arg3[%c4_31] : memref<99xf32, #tpu.memory_space<smem>>
    %c53 = arith.constant 53 : index
    %86 = memref.load %arg3[%c53] : memref<99xf32, #tpu.memory_space<smem>>
    %87 = vector.broadcast %85 : f32 to vector<4x1xf32>
    %88 = vector.broadcast %86 : f32 to vector<4x1xf32>
    %89 = arith.select %50, %87, %88 : vector<4x1xi1>, vector<4x1xf32>
    %90 = vector.broadcast %89 : vector<4x1xf32> to vector<4x256xf32>
    %91 = arith.mulf %90, %39 : vector<4x256xf32>
    %92 = arith.addf %84, %91 : vector<4x256xf32>
    %c5_32 = arith.constant 5 : index
    %93 = memref.load %arg3[%c5_32] : memref<99xf32, #tpu.memory_space<smem>>
    %c54 = arith.constant 54 : index
    %94 = memref.load %arg3[%c54] : memref<99xf32, #tpu.memory_space<smem>>
    %95 = vector.broadcast %93 : f32 to vector<4x1xf32>
    %96 = vector.broadcast %94 : f32 to vector<4x1xf32>
    %97 = arith.select %50, %95, %96 : vector<4x1xi1>, vector<4x1xf32>
    %98 = vector.broadcast %97 : vector<4x1xf32> to vector<4x256xf32>
    %99 = arith.mulf %98, %43 : vector<4x256xf32>
    %100 = arith.addf %92, %99 : vector<4x256xf32>
    %c6_33 = arith.constant 6 : index
    %101 = memref.load %arg3[%c6_33] : memref<99xf32, #tpu.memory_space<smem>>
    %c55 = arith.constant 55 : index
    %102 = memref.load %arg3[%c55] : memref<99xf32, #tpu.memory_space<smem>>
    %103 = vector.broadcast %101 : f32 to vector<4x1xf32>
    %104 = vector.broadcast %102 : f32 to vector<4x1xf32>
    %105 = arith.select %50, %103, %104 : vector<4x1xi1>, vector<4x1xf32>
    %106 = vector.broadcast %105 : vector<4x1xf32> to vector<4x256xf32>
    %107 = arith.mulf %106, %47 : vector<4x256xf32>
    %108 = arith.addf %100, %107 : vector<4x256xf32>
    %c48_i32 = arith.constant 48 : i32
    %109 = tpu.dynamic_rotate %108 by %c48_i32 dim 1 : vector<4x256xf32>, i32 -> vector<4x256xf32>
    %c7 = arith.constant 7 : index
    %c0_34 = arith.constant 0 : index
    %110 = vector.load %arg2[%c7, %c0_34] : memref<16x256xf32, #tpu.memory_space<vmem>>, vector<1x256xf32>
    %111 = vector.broadcast %110 : vector<1x256xf32> to vector<4x256xf32>
    %112 = arith.mulf %109, %111 : vector<4x256xf32>
    %113 = arith.addf %51, %112 : vector<4x256xf32>
    %cst_35 = arith.constant 0.000000e+00 : f32
    %114 = vector.broadcast %cst_35 : f32 to vector<4x256xf32>
    %c7_36 = arith.constant 7 : index
    %115 = memref.load %arg3[%c7_36] : memref<99xf32, #tpu.memory_space<smem>>
    %c56 = arith.constant 56 : index
    %116 = memref.load %arg3[%c56] : memref<99xf32, #tpu.memory_space<smem>>
    %117 = vector.broadcast %115 : f32 to vector<4x1xf32>
    %118 = vector.broadcast %116 : f32 to vector<4x1xf32>
    %119 = arith.select %50, %117, %118 : vector<4x1xi1>, vector<4x1xf32>
    %120 = vector.broadcast %119 : vector<4x1xf32> to vector<4x256xf32>
    %121 = arith.mulf %120, %24 : vector<4x256xf32>
    %122 = arith.addf %114, %121 : vector<4x256xf32>
    %c8 = arith.constant 8 : index
    %123 = memref.load %arg3[%c8] : memref<99xf32, #tpu.memory_space<smem>>
    %c57 = arith.constant 57 : index
    %124 = memref.load %arg3[%c57] : memref<99xf32, #tpu.memory_space<smem>>
    %125 = vector.broadcast %123 : f32 to vector<4x1xf32>
    %126 = vector.broadcast %124 : f32 to vector<4x1xf32>
    %127 = arith.select %50, %125, %126 : vector<4x1xi1>, vector<4x1xf32>
    %128 = vector.broadcast %127 : vector<4x1xf32> to vector<4x256xf32>
    %129 = arith.mulf %128, %28 : vector<4x256xf32>
    %130 = arith.addf %122, %129 : vector<4x256xf32>
    %c9 = arith.constant 9 : index
    %131 = memref.load %arg3[%c9] : memref<99xf32, #tpu.memory_space<smem>>
    %c58 = arith.constant 58 : index
    %132 = memref.load %arg3[%c58] : memref<99xf32, #tpu.memory_space<smem>>
    %133 = vector.broadcast %131 : f32 to vector<4x1xf32>
    %134 = vector.broadcast %132 : f32 to vector<4x1xf32>
    %135 = arith.select %50, %133, %134 : vector<4x1xi1>, vector<4x1xf32>
    %136 = vector.broadcast %135 : vector<4x1xf32> to vector<4x256xf32>
    %137 = arith.mulf %136, %32 : vector<4x256xf32>
    %138 = arith.addf %130, %137 : vector<4x256xf32>
    %c10 = arith.constant 10 : index
    %139 = memref.load %arg3[%c10] : memref<99xf32, #tpu.memory_space<smem>>
    %c59 = arith.constant 59 : index
    %140 = memref.load %arg3[%c59] : memref<99xf32, #tpu.memory_space<smem>>
    %141 = vector.broadcast %139 : f32 to vector<4x1xf32>
    %142 = vector.broadcast %140 : f32 to vector<4x1xf32>
    %143 = arith.select %50, %141, %142 : vector<4x1xi1>, vector<4x1xf32>
    %144 = vector.broadcast %143 : vector<4x1xf32> to vector<4x256xf32>
    %145 = arith.mulf %144, %35 : vector<4x256xf32>
    %146 = arith.addf %138, %145 : vector<4x256xf32>
    %c11 = arith.constant 11 : index
    %147 = memref.load %arg3[%c11] : memref<99xf32, #tpu.memory_space<smem>>
    %c60 = arith.constant 60 : index
    %148 = memref.load %arg3[%c60] : memref<99xf32, #tpu.memory_space<smem>>
    %149 = vector.broadcast %147 : f32 to vector<4x1xf32>
    %150 = vector.broadcast %148 : f32 to vector<4x1xf32>
    %151 = arith.select %50, %149, %150 : vector<4x1xi1>, vector<4x1xf32>
    %152 = vector.broadcast %151 : vector<4x1xf32> to vector<4x256xf32>
    %153 = arith.mulf %152, %39 : vector<4x256xf32>
    %154 = arith.addf %146, %153 : vector<4x256xf32>
    %c12 = arith.constant 12 : index
    %155 = memref.load %arg3[%c12] : memref<99xf32, #tpu.memory_space<smem>>
    %c61 = arith.constant 61 : index
    %156 = memref.load %arg3[%c61] : memref<99xf32, #tpu.memory_space<smem>>
    %157 = vector.broadcast %155 : f32 to vector<4x1xf32>
    %158 = vector.broadcast %156 : f32 to vector<4x1xf32>
    %159 = arith.select %50, %157, %158 : vector<4x1xi1>, vector<4x1xf32>
    %160 = vector.broadcast %159 : vector<4x1xf32> to vector<4x256xf32>
    %161 = arith.mulf %160, %43 : vector<4x256xf32>
    %162 = arith.addf %154, %161 : vector<4x256xf32>
    %c13 = arith.constant 13 : index
    %163 = memref.load %arg3[%c13] : memref<99xf32, #tpu.memory_space<smem>>
    %c62 = arith.constant 62 : index
    %164 = memref.load %arg3[%c62] : memref<99xf32, #tpu.memory_space<smem>>
    %165 = vector.broadcast %163 : f32 to vector<4x1xf32>
    %166 = vector.broadcast %164 : f32 to vector<4x1xf32>
    %167 = arith.select %50, %165, %166 : vector<4x1xi1>, vector<4x1xf32>
    %168 = vector.broadcast %167 : vector<4x1xf32> to vector<4x256xf32>
    %169 = arith.mulf %168, %47 : vector<4x256xf32>
    %170 = arith.addf %162, %169 : vector<4x256xf32>
    %c32_i32 = arith.constant 32 : i32
    %171 = tpu.dynamic_rotate %170 by %c32_i32 dim 1 : vector<4x256xf32>, i32 -> vector<4x256xf32>
    %c8_37 = arith.constant 8 : index
    %c0_38 = arith.constant 0 : index
    %172 = vector.load %arg2[%c8_37, %c0_38] : memref<16x256xf32, #tpu.memory_space<vmem>>, vector<1x256xf32>
    %173 = vector.broadcast %172 : vector<1x256xf32> to vector<4x256xf32>
    %174 = arith.mulf %171, %173 : vector<4x256xf32>
    %175 = arith.addf %113, %174 : vector<4x256xf32>
    %cst_39 = arith.constant 0.000000e+00 : f32
    %176 = vector.broadcast %cst_39 : f32 to vector<4x256xf32>
    %c14 = arith.constant 14 : index
    %177 = memref.load %arg3[%c14] : memref<99xf32, #tpu.memory_space<smem>>
    %c63 = arith.constant 63 : index
    %178 = memref.load %arg3[%c63] : memref<99xf32, #tpu.memory_space<smem>>
    %179 = vector.broadcast %177 : f32 to vector<4x1xf32>
    %180 = vector.broadcast %178 : f32 to vector<4x1xf32>
    %181 = arith.select %50, %179, %180 : vector<4x1xi1>, vector<4x1xf32>
    %182 = vector.broadcast %181 : vector<4x1xf32> to vector<4x256xf32>
    %183 = arith.mulf %182, %24 : vector<4x256xf32>
    %184 = arith.addf %176, %183 : vector<4x256xf32>
    %c15 = arith.constant 15 : index
    %185 = memref.load %arg3[%c15] : memref<99xf32, #tpu.memory_space<smem>>
    %c64 = arith.constant 64 : index
    %186 = memref.load %arg3[%c64] : memref<99xf32, #tpu.memory_space<smem>>
    %187 = vector.broadcast %185 : f32 to vector<4x1xf32>
    %188 = vector.broadcast %186 : f32 to vector<4x1xf32>
    %189 = arith.select %50, %187, %188 : vector<4x1xi1>, vector<4x1xf32>
    %190 = vector.broadcast %189 : vector<4x1xf32> to vector<4x256xf32>
    %191 = arith.mulf %190, %28 : vector<4x256xf32>
    %192 = arith.addf %184, %191 : vector<4x256xf32>
    %c16 = arith.constant 16 : index
    %193 = memref.load %arg3[%c16] : memref<99xf32, #tpu.memory_space<smem>>
    %c65 = arith.constant 65 : index
    %194 = memref.load %arg3[%c65] : memref<99xf32, #tpu.memory_space<smem>>
    %195 = vector.broadcast %193 : f32 to vector<4x1xf32>
    %196 = vector.broadcast %194 : f32 to vector<4x1xf32>
    %197 = arith.select %50, %195, %196 : vector<4x1xi1>, vector<4x1xf32>
    %198 = vector.broadcast %197 : vector<4x1xf32> to vector<4x256xf32>
    %199 = arith.mulf %198, %32 : vector<4x256xf32>
    %200 = arith.addf %192, %199 : vector<4x256xf32>
    %c17 = arith.constant 17 : index
    %201 = memref.load %arg3[%c17] : memref<99xf32, #tpu.memory_space<smem>>
    %c66 = arith.constant 66 : index
    %202 = memref.load %arg3[%c66] : memref<99xf32, #tpu.memory_space<smem>>
    %203 = vector.broadcast %201 : f32 to vector<4x1xf32>
    %204 = vector.broadcast %202 : f32 to vector<4x1xf32>
    %205 = arith.select %50, %203, %204 : vector<4x1xi1>, vector<4x1xf32>
    %206 = vector.broadcast %205 : vector<4x1xf32> to vector<4x256xf32>
    %207 = arith.mulf %206, %35 : vector<4x256xf32>
    %208 = arith.addf %200, %207 : vector<4x256xf32>
    %c18 = arith.constant 18 : index
    %209 = memref.load %arg3[%c18] : memref<99xf32, #tpu.memory_space<smem>>
    %c67 = arith.constant 67 : index
    %210 = memref.load %arg3[%c67] : memref<99xf32, #tpu.memory_space<smem>>
    %211 = vector.broadcast %209 : f32 to vector<4x1xf32>
    %212 = vector.broadcast %210 : f32 to vector<4x1xf32>
    %213 = arith.select %50, %211, %212 : vector<4x1xi1>, vector<4x1xf32>
    %214 = vector.broadcast %213 : vector<4x1xf32> to vector<4x256xf32>
    %215 = arith.mulf %214, %39 : vector<4x256xf32>
    %216 = arith.addf %208, %215 : vector<4x256xf32>
    %c19 = arith.constant 19 : index
    %217 = memref.load %arg3[%c19] : memref<99xf32, #tpu.memory_space<smem>>
    %c68 = arith.constant 68 : index
    %218 = memref.load %arg3[%c68] : memref<99xf32, #tpu.memory_space<smem>>
    %219 = vector.broadcast %217 : f32 to vector<4x1xf32>
    %220 = vector.broadcast %218 : f32 to vector<4x1xf32>
    %221 = arith.select %50, %219, %220 : vector<4x1xi1>, vector<4x1xf32>
    %222 = vector.broadcast %221 : vector<4x1xf32> to vector<4x256xf32>
    %223 = arith.mulf %222, %43 : vector<4x256xf32>
    %224 = arith.addf %216, %223 : vector<4x256xf32>
    %c20 = arith.constant 20 : index
    %225 = memref.load %arg3[%c20] : memref<99xf32, #tpu.memory_space<smem>>
    %c69 = arith.constant 69 : index
    %226 = memref.load %arg3[%c69] : memref<99xf32, #tpu.memory_space<smem>>
    %227 = vector.broadcast %225 : f32 to vector<4x1xf32>
    %228 = vector.broadcast %226 : f32 to vector<4x1xf32>
    %229 = arith.select %50, %227, %228 : vector<4x1xi1>, vector<4x1xf32>
    %230 = vector.broadcast %229 : vector<4x1xf32> to vector<4x256xf32>
    %231 = arith.mulf %230, %47 : vector<4x256xf32>
    %232 = arith.addf %224, %231 : vector<4x256xf32>
    %c16_i32 = arith.constant 16 : i32
    %233 = tpu.dynamic_rotate %232 by %c16_i32 dim 1 : vector<4x256xf32>, i32 -> vector<4x256xf32>
    %c9_40 = arith.constant 9 : index
    %c0_41 = arith.constant 0 : index
    %234 = vector.load %arg2[%c9_40, %c0_41] : memref<16x256xf32, #tpu.memory_space<vmem>>, vector<1x256xf32>
    %235 = vector.broadcast %234 : vector<1x256xf32> to vector<4x256xf32>
    %236 = arith.mulf %233, %235 : vector<4x256xf32>
    %237 = arith.addf %175, %236 : vector<4x256xf32>
    %cst_42 = arith.constant 0.000000e+00 : f32
    %238 = vector.broadcast %cst_42 : f32 to vector<4x256xf32>
    %c21 = arith.constant 21 : index
    %239 = memref.load %arg3[%c21] : memref<99xf32, #tpu.memory_space<smem>>
    %c70 = arith.constant 70 : index
    %240 = memref.load %arg3[%c70] : memref<99xf32, #tpu.memory_space<smem>>
    %241 = vector.broadcast %239 : f32 to vector<4x1xf32>
    %242 = vector.broadcast %240 : f32 to vector<4x1xf32>
    %243 = arith.select %50, %241, %242 : vector<4x1xi1>, vector<4x1xf32>
    %244 = vector.broadcast %243 : vector<4x1xf32> to vector<4x256xf32>
    %245 = arith.mulf %244, %24 : vector<4x256xf32>
    %246 = arith.addf %238, %245 : vector<4x256xf32>
    %c22 = arith.constant 22 : index
    %247 = memref.load %arg3[%c22] : memref<99xf32, #tpu.memory_space<smem>>
    %c71 = arith.constant 71 : index
    %248 = memref.load %arg3[%c71] : memref<99xf32, #tpu.memory_space<smem>>
    %249 = vector.broadcast %247 : f32 to vector<4x1xf32>
    %250 = vector.broadcast %248 : f32 to vector<4x1xf32>
    %251 = arith.select %50, %249, %250 : vector<4x1xi1>, vector<4x1xf32>
    %252 = vector.broadcast %251 : vector<4x1xf32> to vector<4x256xf32>
    %253 = arith.mulf %252, %28 : vector<4x256xf32>
    %254 = arith.addf %246, %253 : vector<4x256xf32>
    %c23 = arith.constant 23 : index
    %255 = memref.load %arg3[%c23] : memref<99xf32, #tpu.memory_space<smem>>
    %c72 = arith.constant 72 : index
    %256 = memref.load %arg3[%c72] : memref<99xf32, #tpu.memory_space<smem>>
    %257 = vector.broadcast %255 : f32 to vector<4x1xf32>
    %258 = vector.broadcast %256 : f32 to vector<4x1xf32>
    %259 = arith.select %50, %257, %258 : vector<4x1xi1>, vector<4x1xf32>
    %260 = vector.broadcast %259 : vector<4x1xf32> to vector<4x256xf32>
    %261 = arith.mulf %260, %32 : vector<4x256xf32>
    %262 = arith.addf %254, %261 : vector<4x256xf32>
    %c24 = arith.constant 24 : index
    %263 = memref.load %arg3[%c24] : memref<99xf32, #tpu.memory_space<smem>>
    %c73 = arith.constant 73 : index
    %264 = memref.load %arg3[%c73] : memref<99xf32, #tpu.memory_space<smem>>
    %265 = vector.broadcast %263 : f32 to vector<4x1xf32>
    %266 = vector.broadcast %264 : f32 to vector<4x1xf32>
    %267 = arith.select %50, %265, %266 : vector<4x1xi1>, vector<4x1xf32>
    %268 = vector.broadcast %267 : vector<4x1xf32> to vector<4x256xf32>
    %269 = arith.mulf %268, %35 : vector<4x256xf32>
    %270 = arith.addf %262, %269 : vector<4x256xf32>
    %c25 = arith.constant 25 : index
    %271 = memref.load %arg3[%c25] : memref<99xf32, #tpu.memory_space<smem>>
    %c74 = arith.constant 74 : index
    %272 = memref.load %arg3[%c74] : memref<99xf32, #tpu.memory_space<smem>>
    %273 = vector.broadcast %271 : f32 to vector<4x1xf32>
    %274 = vector.broadcast %272 : f32 to vector<4x1xf32>
    %275 = arith.select %50, %273, %274 : vector<4x1xi1>, vector<4x1xf32>
    %276 = vector.broadcast %275 : vector<4x1xf32> to vector<4x256xf32>
    %277 = arith.mulf %276, %39 : vector<4x256xf32>
    %278 = arith.addf %270, %277 : vector<4x256xf32>
    %c26 = arith.constant 26 : index
    %279 = memref.load %arg3[%c26] : memref<99xf32, #tpu.memory_space<smem>>
    %c75 = arith.constant 75 : index
    %280 = memref.load %arg3[%c75] : memref<99xf32, #tpu.memory_space<smem>>
    %281 = vector.broadcast %279 : f32 to vector<4x1xf32>
    %282 = vector.broadcast %280 : f32 to vector<4x1xf32>
    %283 = arith.select %50, %281, %282 : vector<4x1xi1>, vector<4x1xf32>
    %284 = vector.broadcast %283 : vector<4x1xf32> to vector<4x256xf32>
    %285 = arith.mulf %284, %43 : vector<4x256xf32>
    %286 = arith.addf %278, %285 : vector<4x256xf32>
    %c27 = arith.constant 27 : index
    %287 = memref.load %arg3[%c27] : memref<99xf32, #tpu.memory_space<smem>>
    %c76 = arith.constant 76 : index
    %288 = memref.load %arg3[%c76] : memref<99xf32, #tpu.memory_space<smem>>
    %289 = vector.broadcast %287 : f32 to vector<4x1xf32>
    %290 = vector.broadcast %288 : f32 to vector<4x1xf32>
    %291 = arith.select %50, %289, %290 : vector<4x1xi1>, vector<4x1xf32>
    %292 = vector.broadcast %291 : vector<4x1xf32> to vector<4x256xf32>
    %293 = arith.mulf %292, %47 : vector<4x256xf32>
    %294 = arith.addf %286, %293 : vector<4x256xf32>
    %c10_43 = arith.constant 10 : index
    %c0_44 = arith.constant 0 : index
    %295 = vector.load %arg2[%c10_43, %c0_44] : memref<16x256xf32, #tpu.memory_space<vmem>>, vector<1x256xf32>
    %296 = vector.broadcast %295 : vector<1x256xf32> to vector<4x256xf32>
    %297 = arith.mulf %294, %296 : vector<4x256xf32>
    %298 = arith.addf %237, %297 : vector<4x256xf32>
    %cst_45 = arith.constant 0.000000e+00 : f32
    %299 = vector.broadcast %cst_45 : f32 to vector<4x256xf32>
    %c28 = arith.constant 28 : index
    %300 = memref.load %arg3[%c28] : memref<99xf32, #tpu.memory_space<smem>>
    %c77 = arith.constant 77 : index
    %301 = memref.load %arg3[%c77] : memref<99xf32, #tpu.memory_space<smem>>
    %302 = vector.broadcast %300 : f32 to vector<4x1xf32>
    %303 = vector.broadcast %301 : f32 to vector<4x1xf32>
    %304 = arith.select %50, %302, %303 : vector<4x1xi1>, vector<4x1xf32>
    %305 = vector.broadcast %304 : vector<4x1xf32> to vector<4x256xf32>
    %306 = arith.mulf %305, %24 : vector<4x256xf32>
    %307 = arith.addf %299, %306 : vector<4x256xf32>
    %c29 = arith.constant 29 : index
    %308 = memref.load %arg3[%c29] : memref<99xf32, #tpu.memory_space<smem>>
    %c78 = arith.constant 78 : index
    %309 = memref.load %arg3[%c78] : memref<99xf32, #tpu.memory_space<smem>>
    %310 = vector.broadcast %308 : f32 to vector<4x1xf32>
    %311 = vector.broadcast %309 : f32 to vector<4x1xf32>
    %312 = arith.select %50, %310, %311 : vector<4x1xi1>, vector<4x1xf32>
    %313 = vector.broadcast %312 : vector<4x1xf32> to vector<4x256xf32>
    %314 = arith.mulf %313, %28 : vector<4x256xf32>
    %315 = arith.addf %307, %314 : vector<4x256xf32>
    %c30 = arith.constant 30 : index
    %316 = memref.load %arg3[%c30] : memref<99xf32, #tpu.memory_space<smem>>
    %c79 = arith.constant 79 : index
    %317 = memref.load %arg3[%c79] : memref<99xf32, #tpu.memory_space<smem>>
    %318 = vector.broadcast %316 : f32 to vector<4x1xf32>
    %319 = vector.broadcast %317 : f32 to vector<4x1xf32>
    %320 = arith.select %50, %318, %319 : vector<4x1xi1>, vector<4x1xf32>
    %321 = vector.broadcast %320 : vector<4x1xf32> to vector<4x256xf32>
    %322 = arith.mulf %321, %32 : vector<4x256xf32>
    %323 = arith.addf %315, %322 : vector<4x256xf32>
    %c31 = arith.constant 31 : index
    %324 = memref.load %arg3[%c31] : memref<99xf32, #tpu.memory_space<smem>>
    %c80 = arith.constant 80 : index
    %325 = memref.load %arg3[%c80] : memref<99xf32, #tpu.memory_space<smem>>
    %326 = vector.broadcast %324 : f32 to vector<4x1xf32>
    %327 = vector.broadcast %325 : f32 to vector<4x1xf32>
    %328 = arith.select %50, %326, %327 : vector<4x1xi1>, vector<4x1xf32>
    %329 = vector.broadcast %328 : vector<4x1xf32> to vector<4x256xf32>
    %330 = arith.mulf %329, %35 : vector<4x256xf32>
    %331 = arith.addf %323, %330 : vector<4x256xf32>
    %c32 = arith.constant 32 : index
    %332 = memref.load %arg3[%c32] : memref<99xf32, #tpu.memory_space<smem>>
    %c81 = arith.constant 81 : index
    %333 = memref.load %arg3[%c81] : memref<99xf32, #tpu.memory_space<smem>>
    %334 = vector.broadcast %332 : f32 to vector<4x1xf32>
    %335 = vector.broadcast %333 : f32 to vector<4x1xf32>
    %336 = arith.select %50, %334, %335 : vector<4x1xi1>, vector<4x1xf32>
    %337 = vector.broadcast %336 : vector<4x1xf32> to vector<4x256xf32>
    %338 = arith.mulf %337, %39 : vector<4x256xf32>
    %339 = arith.addf %331, %338 : vector<4x256xf32>
    %c33 = arith.constant 33 : index
    %340 = memref.load %arg3[%c33] : memref<99xf32, #tpu.memory_space<smem>>
    %c82 = arith.constant 82 : index
    %341 = memref.load %arg3[%c82] : memref<99xf32, #tpu.memory_space<smem>>
    %342 = vector.broadcast %340 : f32 to vector<4x1xf32>
    %343 = vector.broadcast %341 : f32 to vector<4x1xf32>
    %344 = arith.select %50, %342, %343 : vector<4x1xi1>, vector<4x1xf32>
    %345 = vector.broadcast %344 : vector<4x1xf32> to vector<4x256xf32>
    %346 = arith.mulf %345, %43 : vector<4x256xf32>
    %347 = arith.addf %339, %346 : vector<4x256xf32>
    %c34 = arith.constant 34 : index
    %348 = memref.load %arg3[%c34] : memref<99xf32, #tpu.memory_space<smem>>
    %c83 = arith.constant 83 : index
    %349 = memref.load %arg3[%c83] : memref<99xf32, #tpu.memory_space<smem>>
    %350 = vector.broadcast %348 : f32 to vector<4x1xf32>
    %351 = vector.broadcast %349 : f32 to vector<4x1xf32>
    %352 = arith.select %50, %350, %351 : vector<4x1xi1>, vector<4x1xf32>
    %353 = vector.broadcast %352 : vector<4x1xf32> to vector<4x256xf32>
    %354 = arith.mulf %353, %47 : vector<4x256xf32>
    %355 = arith.addf %347, %354 : vector<4x256xf32>
    %c240_i32 = arith.constant 240 : i32
    %356 = tpu.dynamic_rotate %355 by %c240_i32 dim 1 : vector<4x256xf32>, i32 -> vector<4x256xf32>
    %c11_46 = arith.constant 11 : index
    %c0_47 = arith.constant 0 : index
    %357 = vector.load %arg2[%c11_46, %c0_47] : memref<16x256xf32, #tpu.memory_space<vmem>>, vector<1x256xf32>
    %358 = vector.broadcast %357 : vector<1x256xf32> to vector<4x256xf32>
    %359 = arith.mulf %356, %358 : vector<4x256xf32>
    %360 = arith.addf %298, %359 : vector<4x256xf32>
    %cst_48 = arith.constant 0.000000e+00 : f32
    %361 = vector.broadcast %cst_48 : f32 to vector<4x256xf32>
    %c35 = arith.constant 35 : index
    %362 = memref.load %arg3[%c35] : memref<99xf32, #tpu.memory_space<smem>>
    %c84 = arith.constant 84 : index
    %363 = memref.load %arg3[%c84] : memref<99xf32, #tpu.memory_space<smem>>
    %364 = vector.broadcast %362 : f32 to vector<4x1xf32>
    %365 = vector.broadcast %363 : f32 to vector<4x1xf32>
    %366 = arith.select %50, %364, %365 : vector<4x1xi1>, vector<4x1xf32>
    %367 = vector.broadcast %366 : vector<4x1xf32> to vector<4x256xf32>
    %368 = arith.mulf %367, %24 : vector<4x256xf32>
    %369 = arith.addf %361, %368 : vector<4x256xf32>
    %c36 = arith.constant 36 : index
    %370 = memref.load %arg3[%c36] : memref<99xf32, #tpu.memory_space<smem>>
    %c85 = arith.constant 85 : index
    %371 = memref.load %arg3[%c85] : memref<99xf32, #tpu.memory_space<smem>>
    %372 = vector.broadcast %370 : f32 to vector<4x1xf32>
    %373 = vector.broadcast %371 : f32 to vector<4x1xf32>
    %374 = arith.select %50, %372, %373 : vector<4x1xi1>, vector<4x1xf32>
    %375 = vector.broadcast %374 : vector<4x1xf32> to vector<4x256xf32>
    %376 = arith.mulf %375, %28 : vector<4x256xf32>
    %377 = arith.addf %369, %376 : vector<4x256xf32>
    %c37 = arith.constant 37 : index
    %378 = memref.load %arg3[%c37] : memref<99xf32, #tpu.memory_space<smem>>
    %c86 = arith.constant 86 : index
    %379 = memref.load %arg3[%c86] : memref<99xf32, #tpu.memory_space<smem>>
    %380 = vector.broadcast %378 : f32 to vector<4x1xf32>
    %381 = vector.broadcast %379 : f32 to vector<4x1xf32>
    %382 = arith.select %50, %380, %381 : vector<4x1xi1>, vector<4x1xf32>
    %383 = vector.broadcast %382 : vector<4x1xf32> to vector<4x256xf32>
    %384 = arith.mulf %383, %32 : vector<4x256xf32>
    %385 = arith.addf %377, %384 : vector<4x256xf32>
    %c38 = arith.constant 38 : index
    %386 = memref.load %arg3[%c38] : memref<99xf32, #tpu.memory_space<smem>>
    %c87 = arith.constant 87 : index
    %387 = memref.load %arg3[%c87] : memref<99xf32, #tpu.memory_space<smem>>
    %388 = vector.broadcast %386 : f32 to vector<4x1xf32>
    %389 = vector.broadcast %387 : f32 to vector<4x1xf32>
    %390 = arith.select %50, %388, %389 : vector<4x1xi1>, vector<4x1xf32>
    %391 = vector.broadcast %390 : vector<4x1xf32> to vector<4x256xf32>
    %392 = arith.mulf %391, %35 : vector<4x256xf32>
    %393 = arith.addf %385, %392 : vector<4x256xf32>
    %c39 = arith.constant 39 : index
    %394 = memref.load %arg3[%c39] : memref<99xf32, #tpu.memory_space<smem>>
    %c88 = arith.constant 88 : index
    %395 = memref.load %arg3[%c88] : memref<99xf32, #tpu.memory_space<smem>>
    %396 = vector.broadcast %394 : f32 to vector<4x1xf32>
    %397 = vector.broadcast %395 : f32 to vector<4x1xf32>
    %398 = arith.select %50, %396, %397 : vector<4x1xi1>, vector<4x1xf32>
    %399 = vector.broadcast %398 : vector<4x1xf32> to vector<4x256xf32>
    %400 = arith.mulf %399, %39 : vector<4x256xf32>
    %401 = arith.addf %393, %400 : vector<4x256xf32>
    %c40 = arith.constant 40 : index
    %402 = memref.load %arg3[%c40] : memref<99xf32, #tpu.memory_space<smem>>
    %c89 = arith.constant 89 : index
    %403 = memref.load %arg3[%c89] : memref<99xf32, #tpu.memory_space<smem>>
    %404 = vector.broadcast %402 : f32 to vector<4x1xf32>
    %405 = vector.broadcast %403 : f32 to vector<4x1xf32>
    %406 = arith.select %50, %404, %405 : vector<4x1xi1>, vector<4x1xf32>
    %407 = vector.broadcast %406 : vector<4x1xf32> to vector<4x256xf32>
    %408 = arith.mulf %407, %43 : vector<4x256xf32>
    %409 = arith.addf %401, %408 : vector<4x256xf32>
    %c41 = arith.constant 41 : index
    %410 = memref.load %arg3[%c41] : memref<99xf32, #tpu.memory_space<smem>>
    %c90 = arith.constant 90 : index
    %411 = memref.load %arg3[%c90] : memref<99xf32, #tpu.memory_space<smem>>
    %412 = vector.broadcast %410 : f32 to vector<4x1xf32>
    %413 = vector.broadcast %411 : f32 to vector<4x1xf32>
    %414 = arith.select %50, %412, %413 : vector<4x1xi1>, vector<4x1xf32>
    %415 = vector.broadcast %414 : vector<4x1xf32> to vector<4x256xf32>
    %416 = arith.mulf %415, %47 : vector<4x256xf32>
    %417 = arith.addf %409, %416 : vector<4x256xf32>
    %c224_i32 = arith.constant 224 : i32
    %418 = tpu.dynamic_rotate %417 by %c224_i32 dim 1 : vector<4x256xf32>, i32 -> vector<4x256xf32>
    %c12_49 = arith.constant 12 : index
    %c0_50 = arith.constant 0 : index
    %419 = vector.load %arg2[%c12_49, %c0_50] : memref<16x256xf32, #tpu.memory_space<vmem>>, vector<1x256xf32>
    %420 = vector.broadcast %419 : vector<1x256xf32> to vector<4x256xf32>
    %421 = arith.mulf %418, %420 : vector<4x256xf32>
    %422 = arith.addf %360, %421 : vector<4x256xf32>
    %cst_51 = arith.constant 0.000000e+00 : f32
    %423 = vector.broadcast %cst_51 : f32 to vector<4x256xf32>
    %c42 = arith.constant 42 : index
    %424 = memref.load %arg3[%c42] : memref<99xf32, #tpu.memory_space<smem>>
    %c91 = arith.constant 91 : index
    %425 = memref.load %arg3[%c91] : memref<99xf32, #tpu.memory_space<smem>>
    %426 = vector.broadcast %424 : f32 to vector<4x1xf32>
    %427 = vector.broadcast %425 : f32 to vector<4x1xf32>
    %428 = arith.select %50, %426, %427 : vector<4x1xi1>, vector<4x1xf32>
    %429 = vector.broadcast %428 : vector<4x1xf32> to vector<4x256xf32>
    %430 = arith.mulf %429, %24 : vector<4x256xf32>
    %431 = arith.addf %423, %430 : vector<4x256xf32>
    %c43 = arith.constant 43 : index
    %432 = memref.load %arg3[%c43] : memref<99xf32, #tpu.memory_space<smem>>
    %c92 = arith.constant 92 : index
    %433 = memref.load %arg3[%c92] : memref<99xf32, #tpu.memory_space<smem>>
    %434 = vector.broadcast %432 : f32 to vector<4x1xf32>
    %435 = vector.broadcast %433 : f32 to vector<4x1xf32>
    %436 = arith.select %50, %434, %435 : vector<4x1xi1>, vector<4x1xf32>
    %437 = vector.broadcast %436 : vector<4x1xf32> to vector<4x256xf32>
    %438 = arith.mulf %437, %28 : vector<4x256xf32>
    %439 = arith.addf %431, %438 : vector<4x256xf32>
    %c44 = arith.constant 44 : index
    %440 = memref.load %arg3[%c44] : memref<99xf32, #tpu.memory_space<smem>>
    %c93 = arith.constant 93 : index
    %441 = memref.load %arg3[%c93] : memref<99xf32, #tpu.memory_space<smem>>
    %442 = vector.broadcast %440 : f32 to vector<4x1xf32>
    %443 = vector.broadcast %441 : f32 to vector<4x1xf32>
    %444 = arith.select %50, %442, %443 : vector<4x1xi1>, vector<4x1xf32>
    %445 = vector.broadcast %444 : vector<4x1xf32> to vector<4x256xf32>
    %446 = arith.mulf %445, %32 : vector<4x256xf32>
    %447 = arith.addf %439, %446 : vector<4x256xf32>
    %c45 = arith.constant 45 : index
    %448 = memref.load %arg3[%c45] : memref<99xf32, #tpu.memory_space<smem>>
    %c94 = arith.constant 94 : index
    %449 = memref.load %arg3[%c94] : memref<99xf32, #tpu.memory_space<smem>>
    %450 = vector.broadcast %448 : f32 to vector<4x1xf32>
    %451 = vector.broadcast %449 : f32 to vector<4x1xf32>
    %452 = arith.select %50, %450, %451 : vector<4x1xi1>, vector<4x1xf32>
    %453 = vector.broadcast %452 : vector<4x1xf32> to vector<4x256xf32>
    %454 = arith.mulf %453, %35 : vector<4x256xf32>
    %455 = arith.addf %447, %454 : vector<4x256xf32>
    %c46 = arith.constant 46 : index
    %456 = memref.load %arg3[%c46] : memref<99xf32, #tpu.memory_space<smem>>
    %c95 = arith.constant 95 : index
    %457 = memref.load %arg3[%c95] : memref<99xf32, #tpu.memory_space<smem>>
    %458 = vector.broadcast %456 : f32 to vector<4x1xf32>
    %459 = vector.broadcast %457 : f32 to vector<4x1xf32>
    %460 = arith.select %50, %458, %459 : vector<4x1xi1>, vector<4x1xf32>
    %461 = vector.broadcast %460 : vector<4x1xf32> to vector<4x256xf32>
    %462 = arith.mulf %461, %39 : vector<4x256xf32>
    %463 = arith.addf %455, %462 : vector<4x256xf32>
    %c47 = arith.constant 47 : index
    %464 = memref.load %arg3[%c47] : memref<99xf32, #tpu.memory_space<smem>>
    %c96 = arith.constant 96 : index
    %465 = memref.load %arg3[%c96] : memref<99xf32, #tpu.memory_space<smem>>
    %466 = vector.broadcast %464 : f32 to vector<4x1xf32>
    %467 = vector.broadcast %465 : f32 to vector<4x1xf32>
    %468 = arith.select %50, %466, %467 : vector<4x1xi1>, vector<4x1xf32>
    %469 = vector.broadcast %468 : vector<4x1xf32> to vector<4x256xf32>
    %470 = arith.mulf %469, %43 : vector<4x256xf32>
    %471 = arith.addf %463, %470 : vector<4x256xf32>
    %c48 = arith.constant 48 : index
    %472 = memref.load %arg3[%c48] : memref<99xf32, #tpu.memory_space<smem>>
    %c97 = arith.constant 97 : index
    %473 = memref.load %arg3[%c97] : memref<99xf32, #tpu.memory_space<smem>>
    %474 = vector.broadcast %472 : f32 to vector<4x1xf32>
    %475 = vector.broadcast %473 : f32 to vector<4x1xf32>
    %476 = arith.select %50, %474, %475 : vector<4x1xi1>, vector<4x1xf32>
    %477 = vector.broadcast %476 : vector<4x1xf32> to vector<4x256xf32>
    %478 = arith.mulf %477, %47 : vector<4x256xf32>
    %479 = arith.addf %471, %478 : vector<4x256xf32>
    %c208_i32 = arith.constant 208 : i32
    %480 = tpu.dynamic_rotate %479 by %c208_i32 dim 1 : vector<4x256xf32>, i32 -> vector<4x256xf32>
    %c13_52 = arith.constant 13 : index
    %c0_53 = arith.constant 0 : index
    %481 = vector.load %arg2[%c13_52, %c0_53] : memref<16x256xf32, #tpu.memory_space<vmem>>, vector<1x256xf32>
    %482 = vector.broadcast %481 : vector<1x256xf32> to vector<4x256xf32>
    %483 = arith.mulf %480, %482 : vector<4x256xf32>
    %484 = arith.addf %422, %483 : vector<4x256xf32>
    %485 = vector.extract_strided_slice %484 {offsets = [0, 0], sizes = [2, 256], strides = [1, 1]} : vector<4x256xf32> to vector<2x256xf32>
    %486 = vector.extract_strided_slice %484 {offsets = [2, 0], sizes = [2, 256], strides = [1, 1]} : vector<4x256xf32> to vector<2x256xf32>
    %487 = arith.addf %485, %486 : vector<2x256xf32>
    %c98 = arith.constant 98 : index
    %488 = memref.load %arg3[%c98] : memref<99xf32, #tpu.memory_space<smem>>
    %489 = vector.broadcast %488 : f32 to vector<2x256xf32>
    %490 = arith.addf %487, %489 : vector<2x256xf32>
    %491 = arith.negf %490 : vector<2x256xf32>
    %492 = math.exp %491 : vector<2x256xf32>
    %cst_54 = arith.constant 1.000000e+00 : f32
    %493 = vector.broadcast %cst_54 : f32 to vector<2x256xf32>
    %494 = arith.addf %493, %492 : vector<2x256xf32>
    %495 = arith.divf %493, %494 : vector<2x256xf32>
    %c0_55 = arith.constant 0 : index
    %c0_56 = arith.constant 0 : index
    %c0_57 = arith.constant 0 : index
    %496 = vector.load %arg1[%c0_55, %c0_56, %c0_57] : memref<2x4x256xf32, #tpu.memory_space<vmem>>, vector<1x4x256xf32>
    %497 = vector.shape_cast %496 : vector<1x4x256xf32> to vector<4x256xf32>
    %498 = vector.extract_strided_slice %495 {offsets = [0, 0], sizes = [1, 256], strides = [1, 1]} : vector<2x256xf32> to vector<1x256xf32>
    %499 = vector.broadcast %498 : vector<1x256xf32> to vector<4x256xf32>
    %500 = arith.mulf %497, %499 : vector<4x256xf32>
    %c0_58 = arith.constant 0 : index
    %c0_59 = arith.constant 0 : index
    %c0_60 = arith.constant 0 : index
    %501 = vector.load %arg4[%c0_58, %c0_59, %c0_60] : memref<2x4x256xf32, #tpu.memory_space<vmem>>, vector<1x4x256xf32>
    %502 = vector.shape_cast %501 : vector<1x4x256xf32> to vector<4x256xf32>
    %503 = vector.shape_cast %500 : vector<4x256xf32> to vector<1x4x256xf32>
    tpu.vector_store %arg4[%c0_58, %c0_59, %c0_60], %503 {strides = array<i32>} : memref<2x4x256xf32, #tpu.memory_space<vmem>>, vector<1x4x256xf32>,
    %c1_61 = arith.constant 1 : index
    %c0_62 = arith.constant 0 : index
    %c0_63 = arith.constant 0 : index
    %504 = vector.load %arg1[%c1_61, %c0_62, %c0_63] : memref<2x4x256xf32, #tpu.memory_space<vmem>>, vector<1x4x256xf32>
    %505 = vector.shape_cast %504 : vector<1x4x256xf32> to vector<4x256xf32>
    %506 = vector.extract_strided_slice %495 {offsets = [1, 0], sizes = [1, 256], strides = [1, 1]} : vector<2x256xf32> to vector<1x256xf32>
    %507 = vector.broadcast %506 : vector<1x256xf32> to vector<4x256xf32>
    %508 = arith.mulf %505, %507 : vector<4x256xf32>
    %c1_64 = arith.constant 1 : index
    %c0_65 = arith.constant 0 : index
    %c0_66 = arith.constant 0 : index
    %509 = vector.load %arg4[%c1_64, %c0_65, %c0_66] : memref<2x4x256xf32, #tpu.memory_space<vmem>>, vector<1x4x256xf32>
    %510 = vector.shape_cast %509 : vector<1x4x256xf32> to vector<4x256xf32>
    %511 = vector.shape_cast %508 : vector<4x256xf32> to vector<1x4x256xf32>
    tpu.vector_store %arg4[%c1_64, %c0_65, %c0_66], %511 {strides = array<i32>} : memref<2x4x256xf32, #tpu.memory_space<vmem>>, vector<1x4x256xf32>,
    return
  }
  func.func @transform_0(%arg0: i32) -> (i32, i32, i32) {
    %c0_i32 = arith.constant 0 : i32
    %c0_i32_0 = arith.constant 0 : i32
    %c0_i32_1 = arith.constant 0 : i32
    return %arg0, %c0_i32, %c0_i32_0 : i32, i32, i32
  }
  func.func @transform_1(%arg0: i32) -> (i32, i32) {
    %c0_i32 = arith.constant 0 : i32
    %c0_i32_0 = arith.constant 0 : i32
    %c0_i32_1 = arith.constant 0 : i32
    return %c0_i32, %c0_i32_0 : i32, i32
  }
  func.func @transform_2(%arg0: i32) -> i32 {
    %c0_i32 = arith.constant 0 : i32
    %c0_i32_0 = arith.constant 0 : i32
    return %c0_i32 : i32
  }
  func.func @transform_3(%arg0: i32) -> (i32, i32, i32) {
    %c0_i32 = arith.constant 0 : i32
    %c0_i32_0 = arith.constant 0 : i32
    %c0_i32_1 = arith.constant 0 : i32
    return %arg0, %c0_i32, %c0_i32_0 : i32, i32, i32
  }
}

</mosaic_0001>

<llo_original>
// kernel: tpu_custom_call.1
$region0: #{tpu_custom_call.1}
  #allocation0 [shape = 'u32[]', space=smem, size = 0x4, offset = 0x4, fixed_abs, tag = 'smem constant byte address 0x4 - core index']
  #allocation1 [shape = 'u32[144,128]{1,0:T(1,128)}', space=vmem, size = 0x12000, scoped, tag = 'internal scratch']
  %s0 = inlined_call_operand.hbm [shape: f32[2,4,256], index: 0, kind: input, shape index: {}]
  %s1 = inlined_call_operand.hbm [shape: f32[16,256], index: 1, kind: input, shape index: {}]
  %s2 = inlined_call_operand.vmem [shape: f32[99], index: 2, kind: input, shape index: {}]
  %s3 = inlined_call_operand.hbm [shape: f32[2,4,256], index: 3, kind: output, shape index: {}]
  %s4 = sld [smem:[#allocation0]]
  $region34: #{tpu_custom_call.1} parent=0
    _
  %s6 = ssub.s32 1, %s4
  %s7 = scalar_select 0, %s6, %s4
  $region1: #{tpu_custom_call.1} parent=0
    #allocation2 [shape = 'u8[8192]{0}', space=vmem, size = 0x2000, scoped, tag = 'input window, operand 0, single buffered']
    #allocation3 [shape = 's32[1]{0}', space=sflag, size = 0x4, scoped, tag = 'scoped memory for tpu_custom_call.1']
    #allocation4 [shape = 's32[1]{0}', space=sflag, size = 0x4, scoped, tag = 'scoped memory for tpu_custom_call.1']
    #allocation5 [shape = 's32[1]{0}', space=sflag, size = 0x4, scoped, tag = 'scoped memory for tpu_custom_call.1']
    #allocation6 [shape = 'u8[16384]{0}', space=vmem, size = 0x4000, scoped, tag = 'input window, operand 1, single buffered']
    #allocation7 [shape = 's32[1]{0}', space=sflag, size = 0x4, scoped, tag = 'scoped memory for tpu_custom_call.1']
    #allocation8 [shape = 'u8[512]{0}', space=smem, size = 0x200, scoped, tag = 'input window, operand 2, single buffered']
    #allocation9 [shape = 'u8[8192]{0}', space=vmem, size = 0x2000, scoped, tag = 'output window, operand 0, single buffered']
    %8 = vsyncpa [#allocation3], 0
    %9 = vsyncpa [#allocation7], 0
    %10 = vsyncpa [#allocation5], 0
    %11 = vsyncpa [#allocation4], 0
    // Predicated region
    $region2: #{tpu_custom_call.1} parent=1 // pred_check
      _
    $region3: #{tpu_custom_call.1} parent=1 // pred_check_branch
      %13 = sbr.rel (0) target = $region5
    $region4: #{tpu_custom_call.1} parent=1 // pred_region
      %s15 = ssub.s32 256, 256
      %16 = vsyncadd [#allocation3], %s15
      %s17 = sshll.u32 [#allocation2], 4
      %s18 = int_to_ptr.vmem [resolvable:$true] %s17
      %23 = dma.hbm_to_vmem [thread:$0]  %s0, 256, %s18, [#allocation3], 128, 128, 8
    $region5: #{tpu_custom_call.1} parent=1 // pred_fallthru
      _
    // Predicated region
    $region6: #{tpu_custom_call.1} parent=1 // pred_check
      _
    $region7: #{tpu_custom_call.1} parent=1 // pred_check_branch
      %25 = sbr.rel (0) target = $region9
    $region8: #{tpu_custom_call.1} parent=1 // pred_region
      %s27 = ssub.s32 512, 512
      %28 = vsyncadd [#allocation7], %s27
      %s29 = sshll.u32 [#allocation6], 4
      %s30 = int_to_ptr.vmem [resolvable:$true] %s29
      %35 = dma.hbm_to_vmem [thread:$0]  %s1, 512, %s30, [#allocation7], 256, 256, 16
    $region9: #{tpu_custom_call.1} parent=1 // pred_fallthru
      _
    // Predicated region
    $region10: #{tpu_custom_call.1} parent=1 // pred_check
      _
    $region11: #{tpu_custom_call.1} parent=1 // pred_check_branch
      %37 = sbr.rel (0) target = $region13
    $region12: #{tpu_custom_call.1} parent=1 // pred_region
      %s39 = ssub.s32 16, 16
      %40 = vsyncadd [#allocation5], %s39
      %s42 = sshll.u32 %s2, 4
      %s43 = int_to_ptr.vmem [resolvable:$true] %s42
      %45 = dma.vmem_to_smem %s43, 16, [#allocation8], [#allocation5]
    $region13: #{tpu_custom_call.1} parent=1 // pred_fallthru
      _
    // Predicated region
    $region14: #{tpu_custom_call.1} parent=1 // pred_check
      _
    $region15: #{tpu_custom_call.1} parent=1 // pred_check_branch
      %47 = sbr.rel (0) target = $region17
    $region16: #{tpu_custom_call.1} parent=1 // pred_region
      %48 = dma.done [#allocation3], 256
    $region17: #{tpu_custom_call.1} parent=1 // pred_fallthru
      _
    // Predicated region
    $region18: #{tpu_custom_call.1} parent=1 // pred_check
      _
    $region19: #{tpu_custom_call.1} parent=1 // pred_check_branch
      %50 = sbr.rel (0) target = $region21
    $region20: #{tpu_custom_call.1} parent=1 // pred_region
      %51 = dma.done [#allocation7], 512
    $region21: #{tpu_custom_call.1} parent=1 // pred_fallthru
      _
    // Predicated region
    $region22: #{tpu_custom_call.1} parent=1 // pred_check
      _
    $region23: #{tpu_custom_call.1} parent=1 // pred_check_branch
      %53 = sbr.rel (0) target = $region25
    $region24: #{tpu_custom_call.1} parent=1 // pred_region
      %54 = dma.done [#allocation5], 16
    $region25: #{tpu_custom_call.1} parent=1 // pred_fallthru
      _
    %55 = sfence
    %v56 = vld [vmem:[#allocation2] sm:$0xff]
    %v58 = vcombine.high %v56, %v56
    %vm60 = vcmask 1043456
    %v61 = vsel %vm60, %v56, -inf
    %v62 = vrot.slane %v61, 4
    %v63 = vmax.f32 %v61, %v62
    %v64 = vrot.slane %v63, 2
    %v65 = vmax.f32 %v63, %v64
    %v66 = vrot.slane %v65, 1
    %v67 = vmax.f32 %v65, %v66
    %v68 = vsel %vm60, %v58, -inf
    %v69 = vrot.slane %v68, 4
    %v70 = vmax.f32 %v68, %v69
    %v71 = vrot.slane %v70, 2
    %v72 = vmax.f32 %v70, %v71
    %v73 = vrot.slane %v72, 1
    %v74 = vmax.f32 %v72, %v73
    %s75 = scalar_lea.vmem [#allocation2], 8
    %v76 = vld [vmem:[%s75] sm:$0xff]
    %v78 = vcombine.high %v76, %v76
    %v80 = vsel %vm60, %v76, -inf
    %v81 = vrot.slane %v80, 4
    %v82 = vmax.f32 %v80, %v81
    %v83 = vrot.slane %v82, 2
    %v84 = vmax.f32 %v82, %v83
    %v85 = vrot.slane %v84, 1
    %v86 = vmax.f32 %v84, %v85
    %v87 = vsel %vm60, %v78, -inf
    %v88 = vrot.slane %v87, 4
    %v89 = vmax.f32 %v87, %v88
    %v90 = vrot.slane %v89, 2
    %v91 = vmax.f32 %v89, %v90
    %v92 = vrot.slane %v91, 1
    %v93 = vmax.f32 %v91, %v92
    %v94 = vsel %vm60, %v56, 0.0
    %v95 = vrot.slane %v94, 4
    %v96 = vadd.f32 %v94, %v95
    %v97 = vrot.slane %v96, 2
    %v98 = vadd.f32 %v96, %v97
    %v99 = vrot.slane %v98, 1
    %v100 = vadd.f32 %v98, %v99
    %v101 = vsel %vm60, %v58, 0.0
    %v102 = vrot.slane %v101, 4
    %v103 = vadd.f32 %v101, %v102
    %v104 = vrot.slane %v103, 2
    %v105 = vadd.f32 %v103, %v104
    %v106 = vrot.slane %v105, 1
    %v107 = vadd.f32 %v105, %v106
    %v108 = vmul.f32 %v100, 0.25
    %v109 = vmul.f32 %v107, 0.25
    %v110 = vsel %vm60, %v76, 0.0
    %v111 = vrot.slane %v110, 4
    %v112 = vadd.f32 %v110, %v111
    %v113 = vrot.slane %v112, 2
    %v114 = vadd.f32 %v112, %v113
    %v115 = vrot.slane %v114, 1
    %v116 = vadd.f32 %v114, %v115
    %v117 = vsel %vm60, %v78, 0.0
    %v118 = vrot.slane %v117, 4
    %v119 = vadd.f32 %v117, %v118
    %v120 = vrot.slane %v119, 2
    %v121 = vadd.f32 %v119, %v120
    %v122 = vrot.slane %v121, 1
    %v123 = vadd.f32 %v121, %v122
    %v124 = vmul.f32 %v116, 0.25
    %v125 = vmul.f32 %v123, 0.25
    %vm126 = vcmask 1040384
    %v127 = vsel %vm126, %v67, %v86
    %v128 = vsel %vm126, %v74, %v93
    %vm129 = vcmask 1041408
    %v130 = vsel %vm129, %v127, %v108
    %v131 = vsel %vm129, %v128, %v109
    %vm132 = vcmask 1042432
    %v133 = vsel %vm132, %v130, %v124
    %v134 = vsel %vm132, %v131, %v125
    %135 = vrot.lane.b32.xlu0 %v133, 3
    %v136 = vpop.permute.xlu0 %135
    %137 = vrot.lane.b32.xlu0 %v134, 3
    %v138 = vpop.permute.xlu0 %137
    %v139 = vlaneseq
    %v140 = vand.u32 %v139, 127
    %vm141 = vcmp.lt.s32.totalorder %v140, 3
    %v142 = vsel %vm141, %v136, %v138
    %v143 = vsel %vm141, %v138, %v136
    %v144 = vld [vmem:[#allocation6] ss:$8 sm:$0x3]
    %v146 = vlaneseq
    %v147 = vshrl.u32 %v146, 7
    %v148 = vsub.s32 0, %v147
    %v149 = vrot.slane %v144, %v148
    %v150 = vlaneseq
    %v151 = vshrl.u32 %v150, 7
    %v152 = vsub.s32 1, %v151
    %v153 = vrot.slane %v144, %v152
    %v156 = vmul.f32 %v143, %v149
    %v157 = vmul.f32 %v142, %v153
    %158 = vrot.lane.b32.xlu0 %v133, 2
    %v159 = vpop.permute.xlu0 %158
    %160 = vrot.lane.b32.xlu0 %v134, 2
    %v161 = vpop.permute.xlu0 %160
    %vm162 = vcmp.lt.s32.totalorder %v140, 2
    %v163 = vsel %vm162, %v159, %v161
    %v164 = vsel %vm162, %v161, %v159
    %s165 = scalar_lea.vmem [#allocation6], 1
    %v166 = vld [vmem:[%s165] ss:$8 sm:$0x3]
    %v168 = vlaneseq
    %v169 = vshrl.u32 %v168, 7
    %v170 = vsub.s32 0, %v169
    %v171 = vrot.slane %v166, %v170
    %v172 = vlaneseq
    %v173 = vshrl.u32 %v172, 7
    %v174 = vsub.s32 1, %v173
    %v175 = vrot.slane %v166, %v174
    %v178 = vmul.f32 %v164, %v171
    %v179 = vmul.f32 %v163, %v175
    %180 = vrot.lane.b32.xlu0 %v133, 1
    %v181 = vpop.permute.xlu0 %180
    %182 = vrot.lane.b32.xlu0 %v134, 1
    %v183 = vpop.permute.xlu0 %182
    %vm184 = vcmp.lt.s32.totalorder %v140, 1
    %v185 = vsel %vm184, %v181, %v183
    %v186 = vsel %vm184, %v183, %v181
    %s187 = scalar_lea.vmem [#allocation6], 2
    %v188 = vld [vmem:[%s187] ss:$8 sm:$0x3]
    %v190 = vlaneseq
    %v191 = vshrl.u32 %v190, 7
    %v192 = vsub.s32 0, %v191
    %v193 = vrot.slane %v188, %v192
    %v194 = vlaneseq
    %v195 = vshrl.u32 %v194, 7
    %v196 = vsub.s32 1, %v195
    %v197 = vrot.slane %v188, %v196
    %v200 = vmul.f32 %v186, %v193
    %v201 = vmul.f32 %v185, %v197
    %s202 = scalar_lea.vmem [#allocation6], 3
    %v203 = vld [vmem:[%s202] ss:$8 sm:$0x3]
    %v205 = vlaneseq
    %v206 = vshrl.u32 %v205, 7
    %v207 = vsub.s32 0, %v206
    %v208 = vrot.slane %v203, %v207
    %v209 = vlaneseq
    %v210 = vshrl.u32 %v209, 7
    %v211 = vsub.s32 1, %v210
    %v212 = vrot.slane %v203, %v211
    %v215 = vmul.f32 %v133, %v208
    %v216 = vmul.f32 %v134, %v212
    %217 = vrot.lane.b32.xlu0 %v133, 127
    %v218 = vpop.permute.xlu0 %217
    %219 = vrot.lane.b32.xlu0 %v134, 127
    %v220 = vpop.permute.xlu0 %219
    %vm221 = vcmp.lt.s32.totalorder %v140, 127
    %v222 = vsel %vm221, %v218, %v220
    %v223 = vsel %vm221, %v220, %v218
    %s224 = scalar_lea.vmem [#allocation6], 4
    %v225 = vld [vmem:[%s224] ss:$8 sm:$0x3]
    %v227 = vlaneseq
    %v228 = vshrl.u32 %v227, 7
    %v229 = vsub.s32 0, %v228
    %v230 = vrot.slane %v225, %v229
    %v231 = vlaneseq
    %v232 = vshrl.u32 %v231, 7
    %v233 = vsub.s32 1, %v232
    %v234 = vrot.slane %v225, %v233
    %v237 = vmul.f32 %v222, %v230
    %v238 = vmul.f32 %v223, %v234
    %239 = vrot.lane.b32.xlu0 %v133, 126
    %v240 = vpop.permute.xlu0 %239
    %241 = vrot.lane.b32.xlu0 %v134, 126
    %v242 = vpop.permute.xlu0 %241
    %vm243 = vcmp.lt.s32.totalorder %v140, 126
    %v244 = vsel %vm243, %v240, %v242
    %v245 = vsel %vm243, %v242, %v240
    %s246 = scalar_lea.vmem [#allocation6], 5
    %v247 = vld [vmem:[%s246] ss:$8 sm:$0x3]
    %v249 = vlaneseq
    %v250 = vshrl.u32 %v249, 7
    %v251 = vsub.s32 0, %v250
    %v252 = vrot.slane %v247, %v251
    %v253 = vlaneseq
    %v254 = vshrl.u32 %v253, 7
    %v255 = vsub.s32 1, %v254
    %v256 = vrot.slane %v247, %v255
    %v259 = vmul.f32 %v244, %v252
    %v260 = vmul.f32 %v245, %v256
    %261 = vrot.lane.b32.xlu0 %v133, 125
    %v262 = vpop.permute.xlu0 %261
    %263 = vrot.lane.b32.xlu0 %v134, 125
    %v264 = vpop.permute.xlu0 %263
    %vm265 = vcmp.lt.s32.totalorder %v140, 125
    %v266 = vsel %vm265, %v262, %v264
    %v267 = vsel %vm265, %v264, %v262
    %s268 = scalar_lea.vmem [#allocation6], 6
    %v269 = vld [vmem:[%s268] ss:$8 sm:$0x3]
    %v271 = vlaneseq
    %v272 = vshrl.u32 %v271, 7
    %v273 = vsub.s32 0, %v272
    %v274 = vrot.slane %v269, %v273
    %v275 = vlaneseq
    %v276 = vshrl.u32 %v275, 7
    %v277 = vsub.s32 1, %v276
    %v278 = vrot.slane %v269, %v277
    %v281 = vmul.f32 %v266, %v274
    %v282 = vmul.f32 %v267, %v278
    %v283 = vlaneseq
    %v284 = vshrl.u32 %v283, 7
    %vm285 = vcmp.lt.s32.totalorder %v284, 2
    %s286 = sld [smem:[#allocation8]]
    %s287 = sld [smem:[#allocation8 + $0x31]]
    %v288 = vstv %s286
    %v289 = vstv %s287
    %v290 = vsel %vm285, %v288, %v289
    %v291 = vmul.f32 %v290, %v156
    %v292 = vmul.f32 %v290, %v157
    %v293 = vadd.f32 %v291, 0.0
    %v294 = vadd.f32 %v292, 0.0
    %s295 = sld [smem:[#allocation8 + $0x1]]
    %s296 = sld [smem:[#allocation8 + $0x32]]
    %v297 = vstv %s295
    %v298 = vstv %s296
    %v299 = vsel %vm285, %v297, %v298
    %v300 = vmul.f32 %v299, %v178
    %v301 = vmul.f32 %v299, %v179
    %v302 = vadd.f32 %v293, %v300
    %v303 = vadd.f32 %v294, %v301
    %s304 = sld [smem:[#allocation8 + $0x2]]
    %s305 = sld [smem:[#allocation8 + $0x33]]
    %v306 = vstv %s304
    %v307 = vstv %s305
    %v308 = vsel %vm285, %v306, %v307
    %v309 = vmul.f32 %v308, %v200
    %v310 = vmul.f32 %v308, %v201
    %v311 = vadd.f32 %v302, %v309
    %v312 = vadd.f32 %v303, %v310
    %s313 = sld [smem:[#allocation8 + $0x3]]
    %s314 = sld [smem:[#allocation8 + $0x34]]
    %v315 = vstv %s313
    %v316 = vstv %s314
    %v317 = vsel %vm285, %v315, %v316
    %v318 = vmul.f32 %v317, %v215
    %v319 = vmul.f32 %v317, %v216
    %v320 = vadd.f32 %v311, %v318
    %v321 = vadd.f32 %v312, %v319
    %s322 = sld [smem:[#allocation8 + $0x4]]
    %s323 = sld [smem:[#allocation8 + $0x35]]
    %v324 = vstv %s322
    %v325 = vstv %s323
    %v326 = vsel %vm285, %v324, %v325
    %v327 = vmul.f32 %v326, %v237
    %v328 = vmul.f32 %v326, %v238
    %v329 = vadd.f32 %v320, %v327
    %v330 = vadd.f32 %v321, %v328
    %s331 = sld [smem:[#allocation8 + $0x5]]
    %s332 = sld [smem:[#allocation8 + $0x36]]
    %v333 = vstv %s331
    %v334 = vstv %s332
    %v335 = vsel %vm285, %v333, %v334
    %v336 = vmul.f32 %v335, %v259
    %v337 = vmul.f32 %v335, %v260
    %v338 = vadd.f32 %v329, %v336
    %v339 = vadd.f32 %v330, %v337
    %s340 = sld [smem:[#allocation8 + $0x6]]
    %s341 = sld [smem:[#allocation8 + $0x37]]
    %v342 = vstv %s340
    %v343 = vstv %s341
    %v344 = vsel %vm285, %v342, %v343
    %v345 = vmul.f32 %v344, %v281
    %v346 = vmul.f32 %v344, %v282
    %v347 = vadd.f32 %v338, %v345
    %v348 = vadd.f32 %v339, %v346
    %349 = vrot.lane.b32.xlu0 %v347, 48
    %v350 = vpop.permute.xlu0 %349
    %351 = vrot.lane.b32.xlu0 %v348, 48
    %v352 = vpop.permute.xlu0 %351
    %vm353 = vcmp.lt.s32.totalorder %v140, 48
    %v354 = vsel %vm353, %v350, %v352
    %v355 = vsel %vm353, %v352, %v350
    %s356 = scalar_lea.vmem [#allocation6], 7
    %v357 = vld [vmem:[%s356] ss:$8 sm:$0x3]
    %v359 = vlaneseq
    %v360 = vshrl.u32 %v359, 7
    %v361 = vsub.s32 0, %v360
    %v362 = vrot.slane %v357, %v361
    %v363 = vlaneseq
    %v364 = vshrl.u32 %v363, 7
    %v365 = vsub.s32 1, %v364
    %v366 = vrot.slane %v357, %v365
    %v369 = vmul.f32 %v355, %v362
    %v370 = vmul.f32 %v354, %v366
    %v371 = vadd.f32 %v369, 0.0
    %v372 = vadd.f32 %v370, 0.0
    %s373 = sld [smem:[#allocation8 + $0x7]]
    %s374 = sld [smem:[#allocation8 + $0x38]]
    %v375 = vstv %s373
    %v376 = vstv %s374
    %v377 = vsel %vm285, %v375, %v376
    %v378 = vmul.f32 %v377, %v156
    %v379 = vmul.f32 %v377, %v157
    %v380 = vadd.f32 %v378, 0.0
    %v381 = vadd.f32 %v379, 0.0
    %s382 = sld [smem:[#allocation8 + $0x8]]
    %s383 = sld [smem:[#allocation8 + $0x39]]
    %v384 = vstv %s382
    %v385 = vstv %s383
    %v386 = vsel %vm285, %v384, %v385
    %v387 = vmul.f32 %v386, %v178
    %v388 = vmul.f32 %v386, %v179
    %v389 = vadd.f32 %v380, %v387
    %v390 = vadd.f32 %v381, %v388
    %s391 = sld [smem:[#allocation8 + $0x9]]
    %s392 = sld [smem:[#allocation8 + $0x3a]]
    %v393 = vstv %s391
    %v394 = vstv %s392
    %v395 = vsel %vm285, %v393, %v394
    %v396 = vmul.f32 %v395, %v200
    %v397 = vmul.f32 %v395, %v201
    %v398 = vadd.f32 %v389, %v396
    %v399 = vadd.f32 %v390, %v397
    %s400 = sld [smem:[#allocation8 + $0xa]]
    %s401 = sld [smem:[#allocation8 + $0x3b]]
    %v402 = vstv %s400
    %v403 = vstv %s401
    %v404 = vsel %vm285, %v402, %v403
    %v405 = vmul.f32 %v404, %v215
    %v406 = vmul.f32 %v404, %v216
    %v407 = vadd.f32 %v398, %v405
    %v408 = vadd.f32 %v399, %v406
    %s409 = sld [smem:[#allocation8 + $0xb]]
    %s410 = sld [smem:[#allocation8 + $0x3c]]
    %v411 = vstv %s409
    %v412 = vstv %s410
    %v413 = vsel %vm285, %v411, %v412
    %v414 = vmul.f32 %v413, %v237
    %v415 = vmul.f32 %v413, %v238
    %v416 = vadd.f32 %v407, %v414
    %v417 = vadd.f32 %v408, %v415
    %s418 = sld [smem:[#allocation8 + $0xc]]
    %s419 = sld [smem:[#allocation8 + $0x3d]]
    %v420 = vstv %s418
    %v421 = vstv %s419
    %v422 = vsel %vm285, %v420, %v421
    %v423 = vmul.f32 %v422, %v259
    %v424 = vmul.f32 %v422, %v260
    %v425 = vadd.f32 %v416, %v423
    %v426 = vadd.f32 %v417, %v424
    %s427 = sld [smem:[#allocation8 + $0xd]]
    %s428 = sld [smem:[#allocation8 + $0x3e]]
    %v429 = vstv %s427
    %v430 = vstv %s428
    %v431 = vsel %vm285, %v429, %v430
    %v432 = vmul.f32 %v431, %v281
    %v433 = vmul.f32 %v431, %v282
    %v434 = vadd.f32 %v425, %v432
    %v435 = vadd.f32 %v426, %v433
    %436 = vrot.lane.b32.xlu0 %v434, 32
    %v437 = vpop.permute.xlu0 %436
    %438 = vrot.lane.b32.xlu0 %v435, 32
    %v439 = vpop.permute.xlu0 %438
    %vm440 = vcmp.lt.s32.totalorder %v140, 32
    %v441 = vsel %vm440, %v437, %v439
    %v442 = vsel %vm440, %v439, %v437
    %s443 = scalar_lea.vmem [#allocation6], 16
    %v444 = vld [vmem:[%s443] ss:$8 sm:$0x3]
    %v446 = vlaneseq
    %v447 = vshrl.u32 %v446, 7
    %v448 = vsub.s32 0, %v447
    %v449 = vrot.slane %v444, %v448
    %v450 = vlaneseq
    %v451 = vshrl.u32 %v450, 7
    %v452 = vsub.s32 1, %v451
    %v453 = vrot.slane %v444, %v452
    %v456 = vmul.f32 %v442, %v449
    %v457 = vmul.f32 %v441, %v453
    %v458 = vadd.f32 %v371, %v456
    %v459 = vadd.f32 %v372, %v457
    %s460 = sld [smem:[#allocation8 + $0xe]]
    %s461 = sld [smem:[#allocation8 + $0x3f]]
    %v462 = vstv %s460
    %v463 = vstv %s461
    %v464 = vsel %vm285, %v462, %v463
    %v465 = vmul.f32 %v464, %v156
    %v466 = vmul.f32 %v464, %v157
    %v467 = vadd.f32 %v465, 0.0
    %v468 = vadd.f32 %v466, 0.0
    %s469 = sld [smem:[#allocation8 + $0xf]]
    %s470 = sld [smem:[#allocation8 + $0x40]]
    %v471 = vstv %s469
    %v472 = vstv %s470
    %v473 = vsel %vm285, %v471, %v472
    %v474 = vmul.f32 %v473, %v178
    %v475 = vmul.f32 %v473, %v179
    %v476 = vadd.f32 %v467, %v474
    %v477 = vadd.f32 %v468, %v475
    %s478 = sld [smem:[#allocation8 + $0x10]]
    %s479 = sld [smem:[#allocation8 + $0x41]]
    %v480 = vstv %s478
    %v481 = vstv %s479
    %v482 = vsel %vm285, %v480, %v481
    %v483 = vmul.f32 %v482, %v200
    %v484 = vmul.f32 %v482, %v201
    %v485 = vadd.f32 %v476, %v483
    %v486 = vadd.f32 %v477, %v484
    %s487 = sld [smem:[#allocation8 + $0x11]]
    %s488 = sld [smem:[#allocation8 + $0x42]]
    %v489 = vstv %s487
    %v490 = vstv %s488
    %v491 = vsel %vm285, %v489, %v490
    %v492 = vmul.f32 %v491, %v215
    %v493 = vmul.f32 %v491, %v216
    %v494 = vadd.f32 %v485, %v492
    %v495 = vadd.f32 %v486, %v493
    %s496 = sld [smem:[#allocation8 + $0x12]]
    %s497 = sld [smem:[#allocation8 + $0x43]]
    %v498 = vstv %s496
    %v499 = vstv %s497
    %v500 = vsel %vm285, %v498, %v499
    %v501 = vmul.f32 %v500, %v237
    %v502 = vmul.f32 %v500, %v238
    %v503 = vadd.f32 %v494, %v501
    %v504 = vadd.f32 %v495, %v502
    %s505 = sld [smem:[#allocation8 + $0x13]]
    %s506 = sld [smem:[#allocation8 + $0x44]]
    %v507 = vstv %s505
    %v508 = vstv %s506
    %v509 = vsel %vm285, %v507, %v508
    %v510 = vmul.f32 %v509, %v259
    %v511 = vmul.f32 %v509, %v260
    %v512 = vadd.f32 %v503, %v510
    %v513 = vadd.f32 %v504, %v511
    %s514 = sld [smem:[#allocation8 + $0x14]]
    %s515 = sld [smem:[#allocation8 + $0x45]]
    %v516 = vstv %s514
    %v517 = vstv %s515
    %v518 = vsel %vm285, %v516, %v517
    %v519 = vmul.f32 %v518, %v281
    %v520 = vmul.f32 %v518, %v282
    %v521 = vadd.f32 %v512, %v519
    %v522 = vadd.f32 %v513, %v520
    %523 = vrot.lane.b32.xlu0 %v521, 16
    %v524 = vpop.permute.xlu0 %523
    %525 = vrot.lane.b32.xlu0 %v522, 16
    %v526 = vpop.permute.xlu0 %525
    %vm527 = vcmp.lt.s32.totalorder %v140, 16
    %v528 = vsel %vm527, %v524, %v526
    %v529 = vsel %vm527, %v526, %v524
    %s530 = scalar_lea.vmem [#allocation6], 17
    %v531 = vld [vmem:[%s530] ss:$8 sm:$0x3]
    %v533 = vlaneseq
    %v534 = vshrl.u32 %v533, 7
    %v535 = vsub.s32 0, %v534
    %v536 = vrot.slane %v531, %v535
    %v537 = vlaneseq
    %v538 = vshrl.u32 %v537, 7
    %v539 = vsub.s32 1, %v538
    %v540 = vrot.slane %v531, %v539
    %v543 = vmul.f32 %v529, %v536
    %v544 = vmul.f32 %v528, %v540
    %v545 = vadd.f32 %v458, %v543
    %v546 = vadd.f32 %v459, %v544
    %s547 = sld [smem:[#allocation8 + $0x15]]
    %s548 = sld [smem:[#allocation8 + $0x46]]
    %v549 = vstv %s547
    %v550 = vstv %s548
    %v551 = vsel %vm285, %v549, %v550
    %v552 = vmul.f32 %v551, %v156
    %v553 = vmul.f32 %v551, %v157
    %v554 = vadd.f32 %v552, 0.0
    %v555 = vadd.f32 %v553, 0.0
    %s556 = sld [smem:[#allocation8 + $0x16]]
    %s557 = sld [smem:[#allocation8 + $0x47]]
    %v558 = vstv %s556
    %v559 = vstv %s557
    %v560 = vsel %vm285, %v558, %v559
    %v561 = vmul.f32 %v560, %v178
    %v562 = vmul.f32 %v560, %v179
    %v563 = vadd.f32 %v554, %v561
    %v564 = vadd.f32 %v555, %v562
    %s565 = sld [smem:[#allocation8 + $0x17]]
    %s566 = sld [smem:[#allocation8 + $0x48]]
    %v567 = vstv %s565
    %v568 = vstv %s566
    %v569 = vsel %vm285, %v567, %v568
    %v570 = vmul.f32 %v569, %v200
    %v571 = vmul.f32 %v569, %v201
    %v572 = vadd.f32 %v563, %v570
    %v573 = vadd.f32 %v564, %v571
    %s574 = sld [smem:[#allocation8 + $0x18]]
    %s575 = sld [smem:[#allocation8 + $0x49]]
    %v576 = vstv %s574
    %v577 = vstv %s575
    %v578 = vsel %vm285, %v576, %v577
    %v579 = vmul.f32 %v578, %v215
    %v580 = vmul.f32 %v578, %v216
    %v581 = vadd.f32 %v572, %v579
    %v582 = vadd.f32 %v573, %v580
    %s583 = sld [smem:[#allocation8 + $0x19]]
    %s584 = sld [smem:[#allocation8 + $0x4a]]
    %v585 = vstv %s583
    %v586 = vstv %s584
    %v587 = vsel %vm285, %v585, %v586
    %v588 = vmul.f32 %v587, %v237
    %v589 = vmul.f32 %v587, %v238
    %v590 = vadd.f32 %v581, %v588
    %v591 = vadd.f32 %v582, %v589
    %s592 = sld [smem:[#allocation8 + $0x1a]]
    %s593 = sld [smem:[#allocation8 + $0x4b]]
    %v594 = vstv %s592
    %v595 = vstv %s593
    %v596 = vsel %vm285, %v594, %v595
    %v597 = vmul.f32 %v596, %v259
    %v598 = vmul.f32 %v596, %v260
    %v599 = vadd.f32 %v590, %v597
    %v600 = vadd.f32 %v591, %v598
    %s601 = sld [smem:[#allocation8 + $0x1b]]
    %s602 = sld [smem:[#allocation8 + $0x4c]]
    %v603 = vstv %s601
    %v604 = vstv %s602
    %v605 = vsel %vm285, %v603, %v604
    %v606 = vmul.f32 %v605, %v281
    %v607 = vmul.f32 %v605, %v282
    %v608 = vadd.f32 %v599, %v606
    %v609 = vadd.f32 %v600, %v607
    %s610 = scalar_lea.vmem [#allocation6], 18
    %v611 = vld [vmem:[%s610] ss:$8 sm:$0x3]
    %v613 = vlaneseq
    %v614 = vshrl.u32 %v613, 7
    %v615 = vsub.s32 0, %v614
    %v616 = vrot.slane %v611, %v615
    %v617 = vlaneseq
    %v618 = vshrl.u32 %v617, 7
    %v619 = vsub.s32 1, %v618
    %v620 = vrot.slane %v611, %v619
    %v623 = vmul.f32 %v608, %v616
    %v624 = vmul.f32 %v609, %v620
    %v625 = vadd.f32 %v545, %v623
    %v626 = vadd.f32 %v546, %v624
    %s627 = sld [smem:[#allocation8 + $0x1c]]
    %s628 = sld [smem:[#allocation8 + $0x4d]]
    %v629 = vstv %s627
    %v630 = vstv %s628
    %v631 = vsel %vm285, %v629, %v630
    %v632 = vmul.f32 %v631, %v156
    %v633 = vmul.f32 %v631, %v157
    %v634 = vadd.f32 %v632, 0.0
    %v635 = vadd.f32 %v633, 0.0
    %s636 = sld [smem:[#allocation8 + $0x1d]]
    %s637 = sld [smem:[#allocation8 + $0x4e]]
    %v638 = vstv %s636
    %v639 = vstv %s637
    %v640 = vsel %vm285, %v638, %v639
    %v641 = vmul.f32 %v640, %v178
    %v642 = vmul.f32 %v640, %v179
    %v643 = vadd.f32 %v634, %v641
    %v644 = vadd.f32 %v635, %v642
    %s645 = sld [smem:[#allocation8 + $0x1e]]
    %s646 = sld [smem:[#allocation8 + $0x4f]]
    %v647 = vstv %s645
    %v648 = vstv %s646
    %v649 = vsel %vm285, %v647, %v648
    %v650 = vmul.f32 %v649, %v200
    %v651 = vmul.f32 %v649, %v201
    %v652 = vadd.f32 %v643, %v650
    %v653 = vadd.f32 %v644, %v651
    %s654 = sld [smem:[#allocation8 + $0x1f]]
    %s655 = sld [smem:[#allocation8 + $0x50]]
    %v656 = vstv %s654
    %v657 = vstv %s655
    %v658 = vsel %vm285, %v656, %v657
    %v659 = vmul.f32 %v658, %v215
    %v660 = vmul.f32 %v658, %v216
    %v661 = vadd.f32 %v652, %v659
    %v662 = vadd.f32 %v653, %v660
    %s663 = sld [smem:[#allocation8 + $0x20]]
    %s664 = sld [smem:[#allocation8 + $0x51]]
    %v665 = vstv %s663
    %v666 = vstv %s664
    %v667 = vsel %vm285, %v665, %v666
    %v668 = vmul.f32 %v667, %v237
    %v669 = vmul.f32 %v667, %v238
    %v670 = vadd.f32 %v661, %v668
    %v671 = vadd.f32 %v662, %v669
    %s672 = sld [smem:[#allocation8 + $0x21]]
    %s673 = sld [smem:[#allocation8 + $0x52]]
    %v674 = vstv %s672
    %v675 = vstv %s673
    %v676 = vsel %vm285, %v674, %v675
    %v677 = vmul.f32 %v676, %v259
    %v678 = vmul.f32 %v676, %v260
    %v679 = vadd.f32 %v670, %v677
    %v680 = vadd.f32 %v671, %v678
    %s681 = sld [smem:[#allocation8 + $0x22]]
    %s682 = sld [smem:[#allocation8 + $0x53]]
    %v683 = vstv %s681
    %v684 = vstv %s682
    %v685 = vsel %vm285, %v683, %v684
    %v686 = vmul.f32 %v685, %v281
    %v687 = vmul.f32 %v685, %v282
    %v688 = vadd.f32 %v679, %v686
    %v689 = vadd.f32 %v680, %v687
    %690 = vrot.lane.b32.xlu0 %v688, 112
    %v691 = vpop.permute.xlu0 %690
    %692 = vrot.lane.b32.xlu0 %v689, 112
    %v693 = vpop.permute.xlu0 %692
    %vm694 = vcmp.lt.s32.totalorder %v140, 112
    %v695 = vsel %vm694, %v691, %v693
    %v696 = vsel %vm694, %v693, %v691
    %s697 = scalar_lea.vmem [#allocation6], 19
    %v698 = vld [vmem:[%s697] ss:$8 sm:$0x3]
    %v700 = vlaneseq
    %v701 = vshrl.u32 %v700, 7
    %v702 = vsub.s32 0, %v701
    %v703 = vrot.slane %v698, %v702
    %v704 = vlaneseq
    %v705 = vshrl.u32 %v704, 7
    %v706 = vsub.s32 1, %v705
    %v707 = vrot.slane %v698, %v706
    %v710 = vmul.f32 %v695, %v703
    %v711 = vmul.f32 %v696, %v707
    %v712 = vadd.f32 %v625, %v710
    %v713 = vadd.f32 %v626, %v711
    %s714 = sld [smem:[#allocation8 + $0x23]]
    %s715 = sld [smem:[#allocation8 + $0x54]]
    %v716 = vstv %s714
    %v717 = vstv %s715
    %v718 = vsel %vm285, %v716, %v717
    %v719 = vmul.f32 %v718, %v156
    %v720 = vmul.f32 %v718, %v157
    %v721 = vadd.f32 %v719, 0.0
    %v722 = vadd.f32 %v720, 0.0
    %s723 = sld [smem:[#allocation8 + $0x24]]
    %s724 = sld [smem:[#allocation8 + $0x55]]
    %v725 = vstv %s723
    %v726 = vstv %s724
    %v727 = vsel %vm285, %v725, %v726
    %v728 = vmul.f32 %v727, %v178
    %v729 = vmul.f32 %v727, %v179
    %v730 = vadd.f32 %v721, %v728
    %v731 = vadd.f32 %v722, %v729
    %s732 = sld [smem:[#allocation8 + $0x25]]
    %s733 = sld [smem:[#allocation8 + $0x56]]
    %v734 = vstv %s732
    %v735 = vstv %s733
    %v736 = vsel %vm285, %v734, %v735
    %v737 = vmul.f32 %v736, %v200
    %v738 = vmul.f32 %v736, %v201
    %v739 = vadd.f32 %v730, %v737
    %v740 = vadd.f32 %v731, %v738
    %s741 = sld [smem:[#allocation8 + $0x26]]
    %s742 = sld [smem:[#allocation8 + $0x57]]
    %v743 = vstv %s741
    %v744 = vstv %s742
    %v745 = vsel %vm285, %v743, %v744
    %v746 = vmul.f32 %v745, %v215
    %v747 = vmul.f32 %v745, %v216
    %v748 = vadd.f32 %v739, %v746
    %v749 = vadd.f32 %v740, %v747
    %s750 = sld [smem:[#allocation8 + $0x27]]
    %s751 = sld [smem:[#allocation8 + $0x58]]
    %v752 = vstv %s750
    %v753 = vstv %s751
    %v754 = vsel %vm285, %v752, %v753
    %v755 = vmul.f32 %v754, %v237
    %v756 = vmul.f32 %v754, %v238
    %v757 = vadd.f32 %v748, %v755
    %v758 = vadd.f32 %v749, %v756
    %s759 = sld [smem:[#allocation8 + $0x28]]
    %s760 = sld [smem:[#allocation8 + $0x59]]
    %v761 = vstv %s759
    %v762 = vstv %s760
    %v763 = vsel %vm285, %v761, %v762
    %v764 = vmul.f32 %v763, %v259
    %v765 = vmul.f32 %v763, %v260
    %v766 = vadd.f32 %v757, %v764
    %v767 = vadd.f32 %v758, %v765
    %s768 = sld [smem:[#allocation8 + $0x29]]
    %s769 = sld [smem:[#allocation8 + $0x5a]]
    %v770 = vstv %s768
    %v771 = vstv %s769
    %v772 = vsel %vm285, %v770, %v771
    %v773 = vmul.f32 %v772, %v281
    %v774 = vmul.f32 %v772, %v282
    %v775 = vadd.f32 %v766, %v773
    %v776 = vadd.f32 %v767, %v774
    %777 = vrot.lane.b32.xlu0 %v775, 96
    %v778 = vpop.permute.xlu0 %777
    %779 = vrot.lane.b32.xlu0 %v776, 96
    %v780 = vpop.permute.xlu0 %779
    %vm781 = vcmp.lt.s32.totalorder %v140, 96
    %v782 = vsel %vm781, %v778, %v780
    %v783 = vsel %vm781, %v780, %v778
    %s784 = scalar_lea.vmem [#allocation6], 20
    %v785 = vld [vmem:[%s784] ss:$8 sm:$0x3]
    %v787 = vlaneseq
    %v788 = vshrl.u32 %v787, 7
    %v789 = vsub.s32 0, %v788
    %v790 = vrot.slane %v785, %v789
    %v791 = vlaneseq
    %v792 = vshrl.u32 %v791, 7
    %v793 = vsub.s32 1, %v792
    %v794 = vrot.slane %v785, %v793
    %v797 = vmul.f32 %v782, %v790
    %v798 = vmul.f32 %v783, %v794
    %v799 = vadd.f32 %v712, %v797
    %v800 = vadd.f32 %v713, %v798
    %s801 = sld [smem:[#allocation8 + $0x2a]]
    %s802 = sld [smem:[#allocation8 + $0x5b]]
    %v803 = vstv %s801
    %v804 = vstv %s802
    %v805 = vsel %vm285, %v803, %v804
    %v806 = vmul.f32 %v805, %v156
    %v807 = vmul.f32 %v805, %v157
    %v808 = vadd.f32 %v806, 0.0
    %v809 = vadd.f32 %v807, 0.0
    %s810 = sld [smem:[#allocation8 + $0x2b]]
    %s811 = sld [smem:[#allocation8 + $0x5c]]
    %v812 = vstv %s810
    %v813 = vstv %s811
    %v814 = vsel %vm285, %v812, %v813
    %v815 = vmul.f32 %v814, %v178
    %v816 = vmul.f32 %v814, %v179
    %v817 = vadd.f32 %v808, %v815
    %v818 = vadd.f32 %v809, %v816
    %s819 = sld [smem:[#allocation8 + $0x2c]]
    %s820 = sld [smem:[#allocation8 + $0x5d]]
    %v821 = vstv %s819
    %v822 = vstv %s820
    %v823 = vsel %vm285, %v821, %v822
    %v824 = vmul.f32 %v823, %v200
    %v825 = vmul.f32 %v823, %v201
    %v826 = vadd.f32 %v817, %v824
    %v827 = vadd.f32 %v818, %v825
    %s828 = sld [smem:[#allocation8 + $0x2d]]
    %s829 = sld [smem:[#allocation8 + $0x5e]]
    %v830 = vstv %s828
    %v831 = vstv %s829
    %v832 = vsel %vm285, %v830, %v831
    %v833 = vmul.f32 %v832, %v215
    %v834 = vmul.f32 %v832, %v216
    %v835 = vadd.f32 %v826, %v833
    %v836 = vadd.f32 %v827, %v834
    %s837 = sld [smem:[#allocation8 + $0x2e]]
    %s838 = sld [smem:[#allocation8 + $0x5f]]
    %v839 = vstv %s837
    %v840 = vstv %s838
    %v841 = vsel %vm285, %v839, %v840
    %v842 = vmul.f32 %v841, %v237
    %v843 = vmul.f32 %v841, %v238
    %v844 = vadd.f32 %v835, %v842
    %v845 = vadd.f32 %v836, %v843
    %s846 = sld [smem:[#allocation8 + $0x2f]]
    %s847 = sld [smem:[#allocation8 + $0x60]]
    %v848 = vstv %s846
    %v849 = vstv %s847
    %v850 = vsel %vm285, %v848, %v849
    %v851 = vmul.f32 %v850, %v259
    %v852 = vmul.f32 %v850, %v260
    %v853 = vadd.f32 %v844, %v851
    %v854 = vadd.f32 %v845, %v852
    %s855 = sld [smem:[#allocation8 + $0x30]]
    %s856 = sld [smem:[#allocation8 + $0x61]]
    %v857 = vstv %s855
    %v858 = vstv %s856
    %v859 = vsel %vm285, %v857, %v858
    %v860 = vmul.f32 %v859, %v281
    %v861 = vmul.f32 %v859, %v282
    %v862 = vadd.f32 %v853, %v860
    %v863 = vadd.f32 %v854, %v861
    %864 = vrot.lane.b32.xlu0 %v862, 80
    %v865 = vpop.permute.xlu0 %864
    %866 = vrot.lane.b32.xlu0 %v863, 80
    %v867 = vpop.permute.xlu0 %866
    %vm868 = vcmp.lt.s32.totalorder %v140, 80
    %v869 = vsel %vm868, %v865, %v867
    %v870 = vsel %vm868, %v867, %v865
    %s871 = scalar_lea.vmem [#allocation6], 21
    %v872 = vld [vmem:[%s871] ss:$8 sm:$0x3]
    %v874 = vlaneseq
    %v875 = vshrl.u32 %v874, 7
    %v876 = vsub.s32 0, %v875
    %v877 = vrot.slane %v872, %v876
    %v878 = vlaneseq
    %v879 = vshrl.u32 %v878, 7
    %v880 = vsub.s32 1, %v879
    %v881 = vrot.slane %v872, %v880
    %v884 = vmul.f32 %v869, %v877
    %v885 = vmul.f32 %v870, %v881
    %v886 = vadd.f32 %v799, %v884
    %v887 = vadd.f32 %v800, %v885
    %v890 = vrot.slane %v886, 2
    %v891 = vrot.slane %v887, 2
    %v894 = vadd.f32 %v886, %v890
    %v895 = vadd.f32 %v887, %v891
    %s896 = sld [smem:[#allocation8 + $0x62]]
    %v897 = vstv %s896
    %v898 = vadd.f32 %v894, %v897
    %v899 = vadd.f32 %v895, %v897
    %v900 = vxor.u32 %v898, 2147483648
    %v901 = vxor.u32 %v899, 2147483648
    %v902 = vmul.f32 %v900, 1.442695
    %v903 = vpow.pop %v902
    %v904 = vmul.f32 %v901, 1.442695
    %v905 = vpow.pop %v904
    %v906 = vadd.f32 %v903, 1.0
    %v907 = vadd.f32 %v905, 1.0
    %v908 = vrcp.pop %v906
    %v909 = vmul.f32 1.0, %v908
    %v910 = vrcp.pop %v907
    %v911 = vmul.f32 1.0, %v910
    %v912 = vlaneseq
    %v913 = vshrl.u32 %v912, 7
    %v914 = vsub.s32 0, %v913
    %v915 = vrot.slane %v909, %v914
    %v916 = vlaneseq
    %v917 = vshrl.u32 %v916, 7
    %v918 = vsub.s32 0, %v917
    %v919 = vrot.slane %v911, %v918
    %v922 = vcombine.low %v915, %v919
    %v924 = vmul.f32 %v56, %v922
    %925 = vst [vmem:[#allocation9] sm:$0xff] %v924
    %v926 = vld [vmem:[%s75] sm:$0xff]
    %v927 = vlaneseq
    %v928 = vshrl.u32 %v927, 7
    %v929 = vsub.s32 1, %v928
    %v930 = vrot.slane %v909, %v929
    %v931 = vlaneseq
    %v932 = vshrl.u32 %v931, 7
    %v933 = vsub.s32 1, %v932
    %v934 = vrot.slane %v911, %v933
    %v937 = vcombine.low %v930, %v934
    %v939 = vmul.f32 %v926, %v937
    %s940 = scalar_lea.vmem [#allocation9], 8
    %941 = vst [vmem:[%s940] sm:$0xff] %v939
    // Predicated region
    $region26: #{tpu_custom_call.1} parent=1 // pred_check
      _
    $region27: #{tpu_custom_call.1} parent=1 // pred_check_branch
      %943 = sbr.rel (0) target = $region29
    $region28: #{tpu_custom_call.1} parent=1 // pred_region
      %s945 = ssub.s32 256, 256
      %946 = vsyncadd [#allocation4], %s945
      %s947 = sshll.u32 [#allocation9], 4
      %s948 = int_to_ptr.vmem [resolvable:$true] %s947
      %953 = dma.vmem_to_hbm [thread:$0]  %s948, 256, %s3, [#allocation4], 128, 128, 8
    $region29: #{tpu_custom_call.1} parent=1 // pred_fallthru
      _
    // Predicated region
    $region30: #{tpu_custom_call.1} parent=1 // pred_check
      _
    $region31: #{tpu_custom_call.1} parent=1 // pred_check_branch
      %955 = sbr.rel (0) target = $region33
    $region32: #{tpu_custom_call.1} parent=1 // pred_region
      %956 = dma.done [#allocation4], 256
    $region33: #{tpu_custom_call.1} parent=1 // pred_fallthru
      _
    %957 = vsyncpa [#allocation3], 1
    %958 = vsyncpa [#allocation7], 1
    %959 = vsyncpa [#allocation4], 1
    %960 = vsyncpa [#allocation5], 1

</llo_original>
